<compile_context>
chip_gen: v7x
topology: tpu7x:2x2x1
jax: 0.10.0
libtpu: 0.0.40
codegen_flags: <defaults>
</compile_context>

<pallas_src>
import functools

import jax
import jax.numpy as jnp
from jax import lax
from jax.experimental import pallas as pl
from jax.experimental.pallas import tpu as pltpu


def _smooth_l1(d):
    ad = jnp.abs(d)
    return jnp.where(ad < 1.0, 0.5 * d * d, ad - 0.5)


def _multibox_loss_kernel(truths_ref, labels_ref, priors_ref, loc_ref, conf_ref,
                          out_ref, *, threshold, negpos_ratio, variance):
    tt = truths_ref[0]        # (O, 4)  corner-form GT boxes
    lab = labels_ref[0]       # (O, 1)  GT labels
    pri = priors_ref[...]     # (4, P)  center-size priors (lane major)
    loc_p = loc_ref[0]        # (4, P)  predicted offsets (lane major)
    cf = conf_ref[0]          # (C, P)  class logits (lane major)

    num_obj = tt.shape[0]
    num_priors = pri.shape[1]
    num_classes = cf.shape[0]

    # ---------------- match(): jaccard(truths, point_form(priors)) -> (O, P) --
    p_cx, p_cy = pri[0:1, :], pri[1:2, :]
    p_w, p_h = pri[2:3, :], pri[3:4, :]
    p_x1 = p_cx - 0.5 * p_w
    p_y1 = p_cy - 0.5 * p_h
    p_x2 = p_cx + 0.5 * p_w
    p_y2 = p_cy + 0.5 * p_h

    t_x1 = tt[:, 0:1]
    t_y1 = tt[:, 1:2]
    t_x2 = tt[:, 2:3]
    t_y2 = tt[:, 3:4]

    ix1 = jnp.maximum(p_x1, t_x1)                        # (O, P)
    iy1 = jnp.maximum(p_y1, t_y1)
    ix2 = jnp.minimum(p_x2, t_x2)
    iy2 = jnp.minimum(p_y2, t_y2)
    inter = jnp.maximum(ix2 - ix1, 0.0) * jnp.maximum(iy2 - iy1, 0.0)
    area_p = (p_x2 - p_x1) * (p_y2 - p_y1)               # (1, P)
    area_t = (t_x2 - t_x1) * (t_y2 - t_y1)               # (O, 1)
    overlaps = inter / (area_p + area_t - inter)         # (O, P)

    o_iota = lax.broadcasted_iota(jnp.int32, (num_obj, num_priors), 0)
    lane_op = lax.broadcasted_iota(jnp.int32, (num_obj, num_priors), 1)

    # best truth per prior (sublane reduce) / best prior per truth (lane reduce)
    best_truth_ov = jnp.max(overlaps, axis=0, keepdims=True)              # (1, P)
    best_truth_idx = jnp.min(
        jnp.where(overlaps >= best_truth_ov, o_iota, num_obj),
        axis=0, keepdims=True)                                            # (1, P)
    best_prior_ov = jnp.max(overlaps, axis=1, keepdims=True)              # (O, 1)
    best_prior_idx = jnp.min(
        jnp.where(overlaps >= best_prior_ov, lane_op, num_priors),
        axis=1, keepdims=True)                                            # (O, 1)

    # bipartite step, vectorized: force each truth's best prior onto that truth
    # (last truth wins on collisions, matching the reference's sequential loop).
    hit = lane_op == best_prior_idx                                       # (O, P)
    forced = jnp.max(jnp.where(hit, o_iota, -1), axis=0, keepdims=True)   # (1, P)
    any_hit = forced >= 0
    best_truth_ov = jnp.where(any_hit, 2.0, best_truth_ov)
    best_truth_idx = jnp.where(any_hit, forced, best_truth_idx)

    onehot_t = best_truth_idx == o_iota                                   # (O, P)

    def gather_truth(col):  # (O, 1) -> (1, P)
        return jnp.sum(jnp.where(onehot_t, col, 0.0), axis=0, keepdims=True)

    m_x1 = gather_truth(t_x1)
    m_y1 = gather_truth(t_y1)
    m_x2 = gather_truth(t_x2)
    m_y2 = gather_truth(t_y2)
    conf_lab = gather_truth(lab)

    # TODO(synk): replicates standard SSD box_utils.match (conf = label + 1);
    # padded / zero-area GT rows are assumed absent (no valid-truth mask here).
    conf_t = jnp.where(best_truth_ov < threshold, 0.0, conf_lab + 1.0)    # (1, P)
    conf_t_i = conf_t.astype(jnp.int32)
    pos = conf_t_i > 0                                                    # (1, P)

    # ---------------- encode(): GT offsets wrt priors -------------------------
    v0, v1 = variance
    g_cx = ((m_x1 + m_x2) * 0.5 - p_cx) / (v0 * p_w)
    g_cy = ((m_y1 + m_y2) * 0.5 - p_cy) / (v0 * p_h)
    g_w = jnp.log((m_x2 - m_x1) / p_w) / v1
    g_h = jnp.log((m_y2 - m_y1) / p_h) / v1

    # ---------------- localization loss: smooth L1 over positives -------------
    l_row = (_smooth_l1(loc_p[0:1, :] - g_cx) + _smooth_l1(loc_p[1:2, :] - g_cy) +
             _smooth_l1(loc_p[2:3, :] - g_w) + _smooth_l1(loc_p[3:4, :] - g_h))
    loss_l_b = jnp.sum(jnp.where(pos, l_row, 0.0), axis=1, keepdims=True)  # (1, 1)

    # ---------------- confidence: single per-prior log-sum-exp ----------------
    c_iota = lax.broadcasted_iota(jnp.int32, (num_classes, num_priors), 0)
    gathered = jnp.sum(jnp.where(c_iota == conf_t_i, cf, 0.0),
                       axis=0, keepdims=True)                              # (1, P)
    col_max = jnp.max(cf, axis=0, keepdims=True)                           # (1, P)
    lse = jnp.log(jnp.sum(jnp.exp(cf - col_max), axis=0, keepdims=True)) + col_max
    ce = lse - gathered                                                    # (1, P) reused for mining + CE
    score = jnp.maximum(jnp.where(pos, 0.0, ce), 0.0)                      # (1, P), >= 0

    num_pos_b = jnp.sum(pos.astype(jnp.float32), axis=1, keepdims=True)    # (1, 1)
    k = jnp.minimum(negpos_ratio * num_pos_b, float(num_priors - 1))       # (1, 1)

    # ---------------- hard negative mining, O(P) ------------------------------
    # The reference sorts the per-prior loss and keeps the top-k negatives; the
    # final loss only needs the *sum* of those top-k values.  Find the k-th
    # largest mining score by bisection on its f32 bit pattern (monotone for
    # x >= 0), take everything strictly above the threshold, and add the tied
    # boundary value in closed form (all ties share the exact same CE value, so
    # which ties get picked cannot change the sum).
    sbits = pltpu.bitcast(score, jnp.int32)                                # (1, P)
    lo0 = jnp.zeros((1, 1), jnp.int32)
    hi0 = jnp.max(sbits, axis=1, keepdims=True)

    def bits_body(_, carry):
        lo, hi = carry
        mid = lo + jnp.right_shift(hi - lo + 1, 1)
        cnt = jnp.sum((sbits >= mid).astype(jnp.float32), axis=1, keepdims=True)
        ok = cnt >= k
        return jnp.where(ok, mid, lo), jnp.where(ok, hi, mid - 1)

    tbits, _ = lax.fori_loop(0, 32, bits_body, (lo0, hi0))

    gt = sbits > tbits                                                     # (1, P) strictly above k-th value
    eq = sbits == tbits                                                    # (1, P) tied with k-th value
    c_gt = jnp.sum(gt.astype(jnp.float32), axis=1, keepdims=True)          # (1, 1)
    rem = jnp.maximum(k - c_gt, 0.0)                                       # (1, 1) tied negatives still needed
    thr_val = jnp.max(jnp.where(eq, score, 0.0), axis=1, keepdims=True)    # (1, 1) shared value of all ties

    # Positives have score bits == 0 <= tbits, so `gt` never double-counts them.
    sel = pos | gt
    loss_c_b = (jnp.sum(jnp.where(sel, ce, 0.0), axis=1, keepdims=True) +
                rem * thr_val)                                             # (1, 1)

    # ---------------- per-image partials into lanes 0..2 of a 128-lane row ----
    lane_o = lax.broadcasted_iota(jnp.int32, (1, 128), 1)
    row = (jnp.where(lane_o == 0, loss_l_b, 0.0) +
           jnp.where(lane_o == 1, loss_c_b, 0.0) +
           jnp.where(lane_o == 2, num_pos_b, 0.0))
    out_ref[...] = row.reshape(1, 1, 128)


def multibox_loss(loc_data, conf_data, priors, truths, labels, *,
                  num_classes=2, overlap_thresh=0.35, negpos_ratio=3,
                  variance=(0.1, 0.2)):
    """Returns (loss_l, loss_c) scalars, matching MultiBoxLoss.forward."""
    B, P, _ = loc_data.shape
    C = conf_data.shape[-1]
    O = truths.shape[1]
    assert C == num_classes

    # Layout plumbing only: put the prior axis on lanes.
    loc_lp = jnp.transpose(loc_data.astype(jnp.float32), (0, 2, 1))     # (B, 4, P)
    conf_lp = jnp.transpose(conf_data.astype(jnp.float32), (0, 2, 1))   # (B, C, P)
    priors_lp = jnp.transpose(priors.astype(jnp.float32), (1, 0))       # (4, P)
    truths_f = truths.astype(jnp.float32)                               # (B, O, 4)
    labels_c = labels.astype(jnp.float32).reshape(B, O, 1)              # (B, O, 1)

    kernel = functools.partial(
        _multibox_loss_kernel,
        threshold=float(overlap_thresh),
        negpos_ratio=float(negpos_ratio),
        variance=(float(variance[0]), float(variance[1])))

    # TODO(synk): for production prior counts, additionally tile the prior axis
    # over a second grid dimension with two-pass mining (per-tile stats first).
    grid_spec = pltpu.PrefetchScalarGridSpec(
        num_scalar_prefetch=0,
        grid=(B,),
        in_specs=[
            pl.BlockSpec((1, O, 4), lambda b: (b, 0, 0)),   # truths
            pl.BlockSpec((1, O, 1), lambda b: (b, 0, 0)),   # labels
            pl.BlockSpec((4, P), lambda b: (0, 0)),         # priors (lane major)
            pl.BlockSpec((1, 4, P), lambda b: (b, 0, 0)),   # loc    (lane major)
            pl.BlockSpec((1, C, P), lambda b: (b, 0, 0)),   # conf   (lane major)
        ],
        out_specs=pl.BlockSpec((1, 1, 128), lambda b: (b, 0, 0)),
    )

    parts = pl.pallas_call(
        kernel,
        out_shape=jax.ShapeDtypeStruct((B, 1, 128), jnp.float32),
        grid_spec=grid_spec,
        compiler_params=pltpu.CompilerParams(
            dimension_semantics=("parallel",)),   # per-image partials -> megacore-friendly
    )(truths_f, labels_c, priors_lp, loc_lp, conf_lp)

    loss_l_sum = jnp.sum(parts[:, 0, 0])
    loss_c_sum = jnp.sum(parts[:, 0, 1])
    n = jnp.sum(parts[:, 0, 2])
    n = jnp.where(n > 0.0, n, jnp.float32(B))   # reference: if N == 0 then N = num
    return loss_l_sum / n, loss_c_sum / n


if __name__ == "__main__":
    key = jax.random.PRNGKey(0)
    B, P, O, C = 2, 256, 4, 2   # batch, num_priors, num_objs, num_classes

    k1, k2, k3, k4, k5, k6 = jax.random.split(key, 6)

    # priors in center-size form, normalized coordinates
    cxy = jax.random.uniform(k1, (P, 2), minval=0.1, maxval=0.9)
    wh = jax.random.uniform(k2, (P, 2), minval=0.05, maxval=0.3)
    priors = jnp.concatenate([cxy, wh], axis=1).astype(jnp.float32)

    # ground-truth boxes in corner form; labels are 0 (face) -> class 1 after +1
    xy1 = jax.random.uniform(k3, (B, O, 2), minval=0.05, maxval=0.55)
    bwh = jax.random.uniform(k4, (B, O, 2), minval=0.1, maxval=0.4)
    truths = jnp.concatenate([xy1, xy1 + bwh], axis=2).astype(jnp.float32)
    labels = jnp.zeros((B, O), jnp.float32)

    # network predictions
    loc_data = 0.1 * jax.random.normal(k5, (B, P, 4), jnp.float32)
    conf_data = jax.random.normal(k6, (B, P, C), jnp.float32)

    loss_l, loss_c = multibox_loss(
        loc_data, conf_data, priors, truths, labels,
        num_classes=C, overlap_thresh=0.35, negpos_ratio=3, variance=(0.1, 0.2))
    jax.block_until_ready((loss_l, loss_c))
    print("KERNEL_OK")
</pallas_src>

<mosaic_0001>
module attributes {stable_mosaic.version = 11 : i64} {
  func.func @_multibox_loss_kernel(%arg0: i32, %arg1: memref<1x4x4xf32, #tpu.memory_space<vmem>>, %arg2: memref<1x4x1xf32, #tpu.memory_space<vmem>>, %arg3: memref<4x256xf32, #tpu.memory_space<vmem>>, %arg4: memref<1x4x256xf32, #tpu.memory_space<vmem>>, %arg5: memref<1x2x256xf32, #tpu.memory_space<vmem>>, %arg6: memref<1x1x128xf32, #tpu.memory_space<vmem>>) attributes {dimension_semantics = [#tpu.dimension_semantics<parallel>], iteration_bounds = array<i64: 2>, scalar_prefetch = 0 : i64, scratch_operands = 0 : i64, tpu.core_type = #tpu.core_type<tc>, window_params = [{transform_indices = @transform_0, window_bounds = array<i64: 1, 4, 4>}, {transform_indices = @transform_1, window_bounds = array<i64: 1, 4, 1>}, {pipeline_mode = #tpu.pipeline_mode<synchronous>, transform_indices = @transform_2, window_bounds = array<i64: 4, 256>}, {transform_indices = @transform_3, window_bounds = array<i64: 1, 4, 256>}, {transform_indices = @transform_4, window_bounds = array<i64: 1, 2, 256>}, {transform_indices = @transform_5, window_bounds = array<i64: 1, 1, 128>}]} {
    %c0 = arith.constant 0 : index
    %c0_0 = arith.constant 0 : index
    %c0_1 = arith.constant 0 : index
    %0 = vector.load %arg1[%c0, %c0_0, %c0_1] : memref<1x4x4xf32, #tpu.memory_space<vmem>>, vector<1x4x4xf32>
    %1 = vector.shape_cast %0 : vector<1x4x4xf32> to vector<4x4xf32>
    %c0_2 = arith.constant 0 : index
    %c0_3 = arith.constant 0 : index
    %c0_4 = arith.constant 0 : index
    %2 = vector.load %arg2[%c0_2, %c0_3, %c0_4] : memref<1x4x1xf32, #tpu.memory_space<vmem>>, vector<1x4x1xf32>
    %3 = vector.shape_cast %2 : vector<1x4x1xf32> to vector<4x1xf32>
    %c0_5 = arith.constant 0 : index
    %c0_6 = arith.constant 0 : index
    %4 = vector.load %arg3[%c0_5, %c0_6] : memref<4x256xf32, #tpu.memory_space<vmem>>, vector<4x256xf32>
    %c0_7 = arith.constant 0 : index
    %c0_8 = arith.constant 0 : index
    %c0_9 = arith.constant 0 : index
    %5 = vector.load %arg4[%c0_7, %c0_8, %c0_9] : memref<1x4x256xf32, #tpu.memory_space<vmem>>, vector<1x4x256xf32>
    %6 = vector.shape_cast %5 : vector<1x4x256xf32> to vector<4x256xf32>
    %c0_10 = arith.constant 0 : index
    %c0_11 = arith.constant 0 : index
    %c0_12 = arith.constant 0 : index
    %7 = vector.load %arg5[%c0_10, %c0_11, %c0_12] : memref<1x2x256xf32, #tpu.memory_space<vmem>>, vector<1x2x256xf32>
    %8 = vector.shape_cast %7 : vector<1x2x256xf32> to vector<2x256xf32>
    %9 = vector.extract_strided_slice %4 {offsets = [0, 0], sizes = [1, 256], strides = [1, 1]} : vector<4x256xf32> to vector<1x256xf32>
    %10 = vector.extract_strided_slice %4 {offsets = [1, 0], sizes = [1, 256], strides = [1, 1]} : vector<4x256xf32> to vector<1x256xf32>
    %11 = vector.extract_strided_slice %4 {offsets = [2, 0], sizes = [1, 256], strides = [1, 1]} : vector<4x256xf32> to vector<1x256xf32>
    %12 = vector.extract_strided_slice %4 {offsets = [3, 0], sizes = [1, 256], strides = [1, 1]} : vector<4x256xf32> to vector<1x256xf32>
    %cst = arith.constant 5.000000e-01 : f32
    %13 = vector.broadcast %cst : f32 to vector<1x256xf32>
    %14 = arith.mulf %13, %11 : vector<1x256xf32>
    %15 = arith.subf %9, %14 : vector<1x256xf32>
    %cst_13 = arith.constant 5.000000e-01 : f32
    %16 = vector.broadcast %cst_13 : f32 to vector<1x256xf32>
    %17 = arith.mulf %16, %12 : vector<1x256xf32>
    %18 = arith.subf %10, %17 : vector<1x256xf32>
    %cst_14 = arith.constant 5.000000e-01 : f32
    %19 = vector.broadcast %cst_14 : f32 to vector<1x256xf32>
    %20 = arith.mulf %19, %11 : vector<1x256xf32>
    %21 = arith.addf %9, %20 : vector<1x256xf32>
    %cst_15 = arith.constant 5.000000e-01 : f32
    %22 = vector.broadcast %cst_15 : f32 to vector<1x256xf32>
    %23 = arith.mulf %22, %12 : vector<1x256xf32>
    %24 = arith.addf %10, %23 : vector<1x256xf32>
    %25 = vector.extract_strided_slice %1 {offsets = [0, 0], sizes = [4, 1], strides = [1, 1]} : vector<4x4xf32> to vector<4x1xf32>
    %26 = vector.extract_strided_slice %1 {offsets = [0, 1], sizes = [4, 1], strides = [1, 1]} : vector<4x4xf32> to vector<4x1xf32>
    %27 = vector.extract_strided_slice %1 {offsets = [0, 2], sizes = [4, 1], strides = [1, 1]} : vector<4x4xf32> to vector<4x1xf32>
    %28 = vector.extract_strided_slice %1 {offsets = [0, 3], sizes = [4, 1], strides = [1, 1]} : vector<4x4xf32> to vector<4x1xf32>
    %29 = vector.broadcast %15 : vector<1x256xf32> to vector<4x256xf32>
    %30 = vector.broadcast %25 : vector<4x1xf32> to vector<4x256xf32>
    %31 = arith.maximumf %29, %30 : vector<4x256xf32>
    %32 = vector.broadcast %18 : vector<1x256xf32> to vector<4x256xf32>
    %33 = vector.broadcast %26 : vector<4x1xf32> to vector<4x256xf32>
    %34 = arith.maximumf %32, %33 : vector<4x256xf32>
    %35 = vector.broadcast %21 : vector<1x256xf32> to vector<4x256xf32>
    %36 = vector.broadcast %27 : vector<4x1xf32> to vector<4x256xf32>
    %37 = arith.minimumf %35, %36 : vector<4x256xf32>
    %38 = vector.broadcast %24 : vector<1x256xf32> to vector<4x256xf32>
    %39 = vector.broadcast %28 : vector<4x1xf32> to vector<4x256xf32>
    %40 = arith.minimumf %38, %39 : vector<4x256xf32>
    %41 = arith.subf %37, %31 : vector<4x256xf32>
    %cst_16 = arith.constant 0.000000e+00 : f32
    %42 = vector.broadcast %cst_16 : f32 to vector<4x256xf32>
    %43 = arith.maximumf %41, %42 : vector<4x256xf32>
    %44 = arith.subf %40, %34 : vector<4x256xf32>
    %cst_17 = arith.constant 0.000000e+00 : f32
    %45 = vector.broadcast %cst_17 : f32 to vector<4x256xf32>
    %46 = arith.maximumf %44, %45 : vector<4x256xf32>
    %47 = arith.mulf %43, %46 : vector<4x256xf32>
    %48 = arith.subf %21, %15 : vector<1x256xf32>
    %49 = arith.subf %24, %18 : vector<1x256xf32>
    %50 = arith.mulf %48, %49 : vector<1x256xf32>
    %51 = arith.subf %27, %25 : vector<4x1xf32>
    %52 = arith.subf %28, %26 : vector<4x1xf32>
    %53 = arith.mulf %51, %52 : vector<4x1xf32>
    %54 = vector.broadcast %50 : vector<1x256xf32> to vector<4x256xf32>
    %55 = vector.broadcast %53 : vector<4x1xf32> to vector<4x256xf32>
    %56 = arith.addf %54, %55 : vector<4x256xf32>
    %57 = arith.subf %56, %47 : vector<4x256xf32>
    %58 = arith.divf %47, %57 : vector<4x256xf32>
    %59 = tpu.iota {dimensions = array<i32: 0>} : vector<4x256xi32>
    %60 = tpu.iota {dimensions = array<i32: 1>} : vector<4x256xi32>
    %cst_18 = arith.constant dense<0xFF800000> : vector<256xf32>
    %61 = vector.multi_reduction <maximumf>, %58, %cst_18 [0] : vector<4x256xf32> to vector<256xf32>
    %62 = vector.shape_cast %61 : vector<256xf32> to vector<1x256xf32>
    %63 = vector.broadcast %62 : vector<1x256xf32> to vector<4x256xf32>
    %64 = arith.cmpf oge, %58, %63 : vector<4x256xf32>
    %c4_i32 = arith.constant 4 : i32
    %65 = vector.broadcast %c4_i32 : i32 to vector<4x256xi32>
    %66 = arith.select %64, %59, %65 : vector<4x256xi1>, vector<4x256xi32>
    %cst_19 = arith.constant dense<2147483647> : vector<256xi32>
    %67 = vector.multi_reduction <minsi>, %66, %cst_19 [0] : vector<4x256xi32> to vector<256xi32>
    %68 = vector.shape_cast %67 : vector<256xi32> to vector<1x256xi32>
    %cst_20 = arith.constant dense<0xFF800000> : vector<4xf32>
    %69 = vector.multi_reduction <maximumf>, %58, %cst_20 [1] : vector<4x256xf32> to vector<4xf32>
    %70 = vector.shape_cast %69 : vector<4xf32> to vector<4x1xf32>
    %71 = vector.broadcast %70 : vector<4x1xf32> to vector<4x256xf32>
    %72 = arith.cmpf oge, %58, %71 : vector<4x256xf32>
    %c256_i32 = arith.constant 256 : i32
    %73 = vector.broadcast %c256_i32 : i32 to vector<4x256xi32>
    %74 = arith.select %72, %60, %73 : vector<4x256xi1>, vector<4x256xi32>
    %cst_21 = arith.constant dense<2147483647> : vector<4xi32>
    %75 = vector.multi_reduction <minsi>, %74, %cst_21 [1] : vector<4x256xi32> to vector<4xi32>
    %76 = vector.shape_cast %75 : vector<4xi32> to vector<4x1xi32>
    %77 = vector.broadcast %76 : vector<4x1xi32> to vector<4x256xi32>
    %78 = arith.cmpi eq, %60, %77 : vector<4x256xi32>
    %c-1_i32 = arith.constant -1 : i32
    %79 = vector.broadcast %c-1_i32 : i32 to vector<4x256xi32>
    %80 = arith.select %78, %59, %79 : vector<4x256xi1>, vector<4x256xi32>
    %cst_22 = arith.constant dense<-2147483648> : vector<256xi32>
    %81 = vector.multi_reduction <maxsi>, %80, %cst_22 [0] : vector<4x256xi32> to vector<256xi32>
    %82 = vector.shape_cast %81 : vector<256xi32> to vector<1x256xi32>
    %c0_i32 = arith.constant 0 : i32
    %83 = vector.broadcast %c0_i32 : i32 to vector<1x256xi32>
    %84 = arith.cmpi sge, %82, %83 : vector<1x256xi32>
    %cst_23 = arith.constant 2.000000e+00 : f32
    %85 = vector.broadcast %cst_23 : f32 to vector<1x256xf32>
    %86 = arith.select %84, %85, %62 : vector<1x256xi1>, vector<1x256xf32>
    %87 = arith.select %84, %82, %68 : vector<1x256xi1>, vector<1x256xi32>
    %88 = vector.broadcast %87 : vector<1x256xi32> to vector<4x256xi32>
    %89 = arith.cmpi eq, %88, %59 : vector<4x256xi32>
    %cst_24 = arith.constant 0.000000e+00 : f32
    %90 = vector.shape_cast %25 : vector<4x1xf32> to vector<4x1xf32>
    %91 = vector.broadcast %90 : vector<4x1xf32> to vector<4x256xf32>
    %92 = vector.broadcast %cst_24 : f32 to vector<4x256xf32>
    %93 = arith.select %89, %91, %92 : vector<4x256xi1>, vector<4x256xf32>
    %cst_25 = arith.constant dense<0.000000e+00> : vector<256xf32>
    %94 = vector.multi_reduction <add>, %93, %cst_25 [0] : vector<4x256xf32> to vector<256xf32>
    %95 = vector.shape_cast %94 : vector<256xf32> to vector<1x256xf32>
    %cst_26 = arith.constant 0.000000e+00 : f32
    %96 = vector.shape_cast %26 : vector<4x1xf32> to vector<4x1xf32>
    %97 = vector.broadcast %96 : vector<4x1xf32> to vector<4x256xf32>
    %98 = vector.broadcast %cst_26 : f32 to vector<4x256xf32>
    %99 = arith.select %89, %97, %98 : vector<4x256xi1>, vector<4x256xf32>
    %cst_27 = arith.constant dense<0.000000e+00> : vector<256xf32>
    %100 = vector.multi_reduction <add>, %99, %cst_27 [0] : vector<4x256xf32> to vector<256xf32>
    %101 = vector.shape_cast %100 : vector<256xf32> to vector<1x256xf32>
    %cst_28 = arith.constant 0.000000e+00 : f32
    %102 = vector.shape_cast %27 : vector<4x1xf32> to vector<4x1xf32>
    %103 = vector.broadcast %102 : vector<4x1xf32> to vector<4x256xf32>
    %104 = vector.broadcast %cst_28 : f32 to vector<4x256xf32>
    %105 = arith.select %89, %103, %104 : vector<4x256xi1>, vector<4x256xf32>
    %cst_29 = arith.constant dense<0.000000e+00> : vector<256xf32>
    %106 = vector.multi_reduction <add>, %105, %cst_29 [0] : vector<4x256xf32> to vector<256xf32>
    %107 = vector.shape_cast %106 : vector<256xf32> to vector<1x256xf32>
    %cst_30 = arith.constant 0.000000e+00 : f32
    %108 = vector.shape_cast %28 : vector<4x1xf32> to vector<4x1xf32>
    %109 = vector.broadcast %108 : vector<4x1xf32> to vector<4x256xf32>
    %110 = vector.broadcast %cst_30 : f32 to vector<4x256xf32>
    %111 = arith.select %89, %109, %110 : vector<4x256xi1>, vector<4x256xf32>
    %cst_31 = arith.constant dense<0.000000e+00> : vector<256xf32>
    %112 = vector.multi_reduction <add>, %111, %cst_31 [0] : vector<4x256xf32> to vector<256xf32>
    %113 = vector.shape_cast %112 : vector<256xf32> to vector<1x256xf32>
    %cst_32 = arith.constant 0.000000e+00 : f32
    %114 = vector.shape_cast %3 : vector<4x1xf32> to vector<4x1xf32>
    %115 = vector.broadcast %114 : vector<4x1xf32> to vector<4x256xf32>
    %116 = vector.broadcast %cst_32 : f32 to vector<4x256xf32>
    %117 = arith.select %89, %115, %116 : vector<4x256xi1>, vector<4x256xf32>
    %cst_33 = arith.constant dense<0.000000e+00> : vector<256xf32>
    %118 = vector.multi_reduction <add>, %117, %cst_33 [0] : vector<4x256xf32> to vector<256xf32>
    %119 = vector.shape_cast %118 : vector<256xf32> to vector<1x256xf32>
    %cst_34 = arith.constant 3.500000e-01 : f32
    %120 = vector.broadcast %cst_34 : f32 to vector<1x256xf32>
    %121 = arith.cmpf olt, %86, %120 : vector<1x256xf32>
    %cst_35 = arith.constant 1.000000e+00 : f32
    %122 = vector.broadcast %cst_35 : f32 to vector<1x256xf32>
    %123 = arith.addf %119, %122 : vector<1x256xf32>
    %cst_36 = arith.constant 0.000000e+00 : f32
    %124 = vector.broadcast %cst_36 : f32 to vector<1x256xf32>
    %125 = arith.select %121, %124, %123 : vector<1x256xi1>, vector<1x256xf32>
    %126 = arith.fptosi %125 : vector<1x256xf32> to vector<1x256xi32>
    %c0_i32_37 = arith.constant 0 : i32
    %127 = vector.broadcast %c0_i32_37 : i32 to vector<1x256xi32>
    %128 = arith.cmpi sgt, %126, %127 : vector<1x256xi32>
    %129 = arith.addf %95, %107 : vector<1x256xf32>
    %cst_38 = arith.constant 5.000000e-01 : f32
    %130 = vector.broadcast %cst_38 : f32 to vector<1x256xf32>
    %131 = arith.mulf %129, %130 : vector<1x256xf32>
    %132 = arith.subf %131, %9 : vector<1x256xf32>
    %cst_39 = arith.constant 1.000000e-01 : f32
    %133 = vector.broadcast %cst_39 : f32 to vector<1x256xf32>
    %134 = arith.mulf %133, %11 : vector<1x256xf32>
    %135 = arith.divf %132, %134 : vector<1x256xf32>
    %136 = arith.addf %101, %113 : vector<1x256xf32>
    %cst_40 = arith.constant 5.000000e-01 : f32
    %137 = vector.broadcast %cst_40 : f32 to vector<1x256xf32>
    %138 = arith.mulf %136, %137 : vector<1x256xf32>
    %139 = arith.subf %138, %10 : vector<1x256xf32>
    %cst_41 = arith.constant 1.000000e-01 : f32
    %140 = vector.broadcast %cst_41 : f32 to vector<1x256xf32>
    %141 = arith.mulf %140, %12 : vector<1x256xf32>
    %142 = arith.divf %139, %141 : vector<1x256xf32>
    %143 = arith.subf %107, %95 : vector<1x256xf32>
    %144 = arith.divf %143, %11 : vector<1x256xf32>
    %145 = math.log %144 : vector<1x256xf32>
    %cst_42 = arith.constant 2.000000e-01 : f32
    %146 = vector.broadcast %cst_42 : f32 to vector<1x256xf32>
    %147 = arith.divf %145, %146 : vector<1x256xf32>
    %148 = arith.subf %113, %101 : vector<1x256xf32>
    %149 = arith.divf %148, %12 : vector<1x256xf32>
    %150 = math.log %149 : vector<1x256xf32>
    %cst_43 = arith.constant 2.000000e-01 : f32
    %151 = vector.broadcast %cst_43 : f32 to vector<1x256xf32>
    %152 = arith.divf %150, %151 : vector<1x256xf32>
    %153 = vector.extract_strided_slice %6 {offsets = [0, 0], sizes = [1, 256], strides = [1, 1]} : vector<4x256xf32> to vector<1x256xf32>
    %154 = arith.subf %153, %135 : vector<1x256xf32>
    %155 = math.absf %154 : vector<1x256xf32>
    %cst_44 = arith.constant 1.000000e+00 : f32
    %156 = vector.broadcast %cst_44 : f32 to vector<1x256xf32>
    %157 = arith.cmpf olt, %155, %156 : vector<1x256xf32>
    %cst_45 = arith.constant 5.000000e-01 : f32
    %158 = vector.broadcast %cst_45 : f32 to vector<1x256xf32>
    %159 = arith.mulf %158, %154 : vector<1x256xf32>
    %160 = arith.mulf %159, %154 : vector<1x256xf32>
    %cst_46 = arith.constant 5.000000e-01 : f32
    %161 = vector.broadcast %cst_46 : f32 to vector<1x256xf32>
    %162 = arith.subf %155, %161 : vector<1x256xf32>
    %163 = arith.select %157, %160, %162 : vector<1x256xi1>, vector<1x256xf32>
    %164 = vector.extract_strided_slice %6 {offsets = [1, 0], sizes = [1, 256], strides = [1, 1]} : vector<4x256xf32> to vector<1x256xf32>
    %165 = arith.subf %164, %142 : vector<1x256xf32>
    %166 = math.absf %165 : vector<1x256xf32>
    %cst_47 = arith.constant 1.000000e+00 : f32
    %167 = vector.broadcast %cst_47 : f32 to vector<1x256xf32>
    %168 = arith.cmpf olt, %166, %167 : vector<1x256xf32>
    %cst_48 = arith.constant 5.000000e-01 : f32
    %169 = vector.broadcast %cst_48 : f32 to vector<1x256xf32>
    %170 = arith.mulf %169, %165 : vector<1x256xf32>
    %171 = arith.mulf %170, %165 : vector<1x256xf32>
    %cst_49 = arith.constant 5.000000e-01 : f32
    %172 = vector.broadcast %cst_49 : f32 to vector<1x256xf32>
    %173 = arith.subf %166, %172 : vector<1x256xf32>
    %174 = arith.select %168, %171, %173 : vector<1x256xi1>, vector<1x256xf32>
    %175 = arith.addf %163, %174 : vector<1x256xf32>
    %176 = vector.extract_strided_slice %6 {offsets = [2, 0], sizes = [1, 256], strides = [1, 1]} : vector<4x256xf32> to vector<1x256xf32>
    %177 = arith.subf %176, %147 : vector<1x256xf32>
    %178 = math.absf %177 : vector<1x256xf32>
    %cst_50 = arith.constant 1.000000e+00 : f32
    %179 = vector.broadcast %cst_50 : f32 to vector<1x256xf32>
    %180 = arith.cmpf olt, %178, %179 : vector<1x256xf32>
    %cst_51 = arith.constant 5.000000e-01 : f32
    %181 = vector.broadcast %cst_51 : f32 to vector<1x256xf32>
    %182 = arith.mulf %181, %177 : vector<1x256xf32>
    %183 = arith.mulf %182, %177 : vector<1x256xf32>
    %cst_52 = arith.constant 5.000000e-01 : f32
    %184 = vector.broadcast %cst_52 : f32 to vector<1x256xf32>
    %185 = arith.subf %178, %184 : vector<1x256xf32>
    %186 = arith.select %180, %183, %185 : vector<1x256xi1>, vector<1x256xf32>
    %187 = arith.addf %175, %186 : vector<1x256xf32>
    %188 = vector.extract_strided_slice %6 {offsets = [3, 0], sizes = [1, 256], strides = [1, 1]} : vector<4x256xf32> to vector<1x256xf32>
    %189 = arith.subf %188, %152 : vector<1x256xf32>
    %190 = math.absf %189 : vector<1x256xf32>
    %cst_53 = arith.constant 1.000000e+00 : f32
    %191 = vector.broadcast %cst_53 : f32 to vector<1x256xf32>
    %192 = arith.cmpf olt, %190, %191 : vector<1x256xf32>
    %cst_54 = arith.constant 5.000000e-01 : f32
    %193 = vector.broadcast %cst_54 : f32 to vector<1x256xf32>
    %194 = arith.mulf %193, %189 : vector<1x256xf32>
    %195 = arith.mulf %194, %189 : vector<1x256xf32>
    %cst_55 = arith.constant 5.000000e-01 : f32
    %196 = vector.broadcast %cst_55 : f32 to vector<1x256xf32>
    %197 = arith.subf %190, %196 : vector<1x256xf32>
    %198 = arith.select %192, %195, %197 : vector<1x256xi1>, vector<1x256xf32>
    %199 = arith.addf %187, %198 : vector<1x256xf32>
    %cst_56 = arith.constant 0.000000e+00 : f32
    %200 = vector.broadcast %cst_56 : f32 to vector<1x256xf32>
    %201 = arith.select %128, %199, %200 : vector<1x256xi1>, vector<1x256xf32>
    %cst_57 = arith.constant dense<0.000000e+00> : vector<1xf32>
    %202 = vector.multi_reduction <add>, %201, %cst_57 [1] : vector<1x256xf32> to vector<1xf32>
    %203 = vector.shape_cast %202 : vector<1xf32> to vector<1x1xf32>
    %204 = tpu.iota {dimensions = array<i32: 0>} : vector<2x256xi32>
    %205 = vector.broadcast %126 : vector<1x256xi32> to vector<2x256xi32>
    %206 = arith.cmpi eq, %204, %205 : vector<2x256xi32>
    %cst_58 = arith.constant 0.000000e+00 : f32
    %207 = vector.broadcast %cst_58 : f32 to vector<2x256xf32>
    %208 = arith.select %206, %8, %207 : vector<2x256xi1>, vector<2x256xf32>
    %cst_59 = arith.constant dense<0.000000e+00> : vector<256xf32>
    %209 = vector.multi_reduction <add>, %208, %cst_59 [0] : vector<2x256xf32> to vector<256xf32>
    %210 = vector.shape_cast %209 : vector<256xf32> to vector<1x256xf32>
    %cst_60 = arith.constant dense<0xFF800000> : vector<256xf32>
    %211 = vector.multi_reduction <maximumf>, %8, %cst_60 [0] : vector<2x256xf32> to vector<256xf32>
    %212 = vector.shape_cast %211 : vector<256xf32> to vector<1x256xf32>
    %213 = vector.broadcast %212 : vector<1x256xf32> to vector<2x256xf32>
    %214 = arith.subf %8, %213 : vector<2x256xf32>
    %215 = math.exp %214 : vector<2x256xf32>
    %cst_61 = arith.constant dense<0.000000e+00> : vector<256xf32>
    %216 = vector.multi_reduction <add>, %215, %cst_61 [0] : vector<2x256xf32> to vector<256xf32>
    %217 = vector.shape_cast %216 : vector<256xf32> to vector<1x256xf32>
    %218 = math.log %217 : vector<1x256xf32>
    %219 = arith.addf %218, %212 : vector<1x256xf32>
    %220 = arith.subf %219, %210 : vector<1x256xf32>
    %cst_62 = arith.constant 0.000000e+00 : f32
    %221 = vector.broadcast %cst_62 : f32 to vector<1x256xf32>
    %222 = arith.select %128, %221, %220 : vector<1x256xi1>, vector<1x256xf32>
    %cst_63 = arith.constant 0.000000e+00 : f32
    %223 = vector.broadcast %cst_63 : f32 to vector<1x256xf32>
    %224 = arith.maximumf %222, %223 : vector<1x256xf32>
    %225 = arith.extui %128 : vector<1x256xi1> to vector<1x256xi32>
    %226 = arith.sitofp %225 : vector<1x256xi32> to vector<1x256xf32>
    %cst_64 = arith.constant dense<0.000000e+00> : vector<1xf32>
    %227 = vector.multi_reduction <add>, %226, %cst_64 [1] : vector<1x256xf32> to vector<1xf32>
    %228 = vector.shape_cast %227 : vector<1xf32> to vector<1x1xf32>
    %cst_65 = arith.constant 3.000000e+00 : f32
    %229 = vector.broadcast %cst_65 : f32 to vector<1x1xf32>
    %230 = arith.mulf %229, %228 : vector<1x1xf32>
    %cst_66 = arith.constant 2.550000e+02 : f32
    %231 = vector.broadcast %cst_66 : f32 to vector<1x1xf32>
    %232 = arith.minimumf %230, %231 : vector<1x1xf32>
    %233 = tpu.bitcast %224 : vector<1x256xf32> -> vector<1x256xi32>
    %c0_i32_67 = arith.constant 0 : i32
    %234 = vector.broadcast %c0_i32_67 : i32 to vector<1x1xi32>
    %cst_68 = arith.constant dense<-2147483648> : vector<1xi32>
    %235 = vector.multi_reduction <maxsi>, %233, %cst_68 [1] : vector<1x256xi32> to vector<1xi32>
    %236 = vector.shape_cast %235 : vector<1xi32> to vector<1x1xi32>
    %c0_i32_69 = arith.constant 0 : i32
    %c32_i32 = arith.constant 32 : i32
    %237 = arith.addi %c0_i32_69, %c32_i32 : i32
    %c1_i32 = arith.constant 1 : i32
    %238:2 = scf.for %arg7 = %c0_i32_69 to %237 step %c1_i32 iter_args(%arg8 = %234, %arg9 = %236) -> (vector<1x1xi32>, vector<1x1xi32>)  : i32 {
      %284 = arith.subi %arg9, %arg8 : vector<1x1xi32>
      %c1_i32_84 = arith.constant 1 : i32
      %285 = vector.broadcast %c1_i32_84 : i32 to vector<1x1xi32>
      %286 = arith.addi %284, %285 : vector<1x1xi32>
      %c1_i32_85 = arith.constant 1 : i32
      %287 = vector.broadcast %c1_i32_85 : i32 to vector<1x1xi32>
      %288 = arith.shrsi %286, %287 : vector<1x1xi32>
      %289 = arith.addi %arg8, %288 : vector<1x1xi32>
      %290 = vector.broadcast %289 : vector<1x1xi32> to vector<1x256xi32>
      %291 = arith.cmpi sge, %233, %290 : vector<1x256xi32>
      %292 = arith.extui %291 : vector<1x256xi1> to vector<1x256xi32>
      %293 = arith.sitofp %292 : vector<1x256xi32> to vector<1x256xf32>
      %cst_86 = arith.constant dense<0.000000e+00> : vector<1xf32>
      %294 = vector.multi_reduction <add>, %293, %cst_86 [1] : vector<1x256xf32> to vector<1xf32>
      %295 = vector.shape_cast %294 : vector<1xf32> to vector<1x1xf32>
      %296 = arith.cmpf oge, %295, %232 : vector<1x1xf32>
      %297 = arith.select %296, %289, %arg8 : vector<1x1xi1>, vector<1x1xi32>
      %c1_i32_87 = arith.constant 1 : i32
      %298 = vector.broadcast %c1_i32_87 : i32 to vector<1x1xi32>
      %299 = arith.subi %289, %298 : vector<1x1xi32>
      %300 = arith.select %296, %arg9, %299 : vector<1x1xi1>, vector<1x1xi32>
      scf.yield %297, %300 : vector<1x1xi32>, vector<1x1xi32>
    }
    %239 = vector.broadcast %238#0 : vector<1x1xi32> to vector<1x256xi32>
    %240 = arith.cmpi sgt, %233, %239 : vector<1x256xi32>
    %241 = vector.broadcast %238#0 : vector<1x1xi32> to vector<1x256xi32>
    %242 = arith.cmpi eq, %233, %241 : vector<1x256xi32>
    %243 = arith.extui %240 : vector<1x256xi1> to vector<1x256xi32>
    %244 = arith.sitofp %243 : vector<1x256xi32> to vector<1x256xf32>
    %cst_70 = arith.constant dense<0.000000e+00> : vector<1xf32>
    %245 = vector.multi_reduction <add>, %244, %cst_70 [1] : vector<1x256xf32> to vector<1xf32>
    %246 = vector.shape_cast %245 : vector<1xf32> to vector<1x1xf32>
    %247 = arith.subf %232, %246 : vector<1x1xf32>
    %cst_71 = arith.constant 0.000000e+00 : f32
    %248 = vector.broadcast %cst_71 : f32 to vector<1x1xf32>
    %249 = arith.maximumf %247, %248 : vector<1x1xf32>
    %cst_72 = arith.constant 0.000000e+00 : f32
    %250 = vector.broadcast %cst_72 : f32 to vector<1x256xf32>
    %251 = arith.select %242, %224, %250 : vector<1x256xi1>, vector<1x256xf32>
    %cst_73 = arith.constant dense<0xFF800000> : vector<1xf32>
    %252 = vector.multi_reduction <maximumf>, %251, %cst_73 [1] : vector<1x256xf32> to vector<1xf32>
    %253 = vector.shape_cast %252 : vector<1xf32> to vector<1x1xf32>
    %254 = arith.ori %128, %240 : vector<1x256xi1>
    %cst_74 = arith.constant 0.000000e+00 : f32
    %255 = vector.broadcast %cst_74 : f32 to vector<1x256xf32>
    %256 = arith.select %254, %220, %255 : vector<1x256xi1>, vector<1x256xf32>
    %cst_75 = arith.constant dense<0.000000e+00> : vector<1xf32>
    %257 = vector.multi_reduction <add>, %256, %cst_75 [1] : vector<1x256xf32> to vector<1xf32>
    %258 = vector.shape_cast %257 : vector<1xf32> to vector<1x1xf32>
    %259 = arith.mulf %249, %253 : vector<1x1xf32>
    %260 = arith.addf %258, %259 : vector<1x1xf32>
    %261 = tpu.iota {dimensions = array<i32: 1>} : vector<1x128xi32>
    %c0_i32_76 = arith.constant 0 : i32
    %262 = vector.broadcast %c0_i32_76 : i32 to vector<1x128xi32>
    %263 = arith.cmpi eq, %261, %262 : vector<1x128xi32>
    %cst_77 = arith.constant 0.000000e+00 : f32
    %264 = vector.shape_cast %203 : vector<1x1xf32> to vector<1x1xf32>
    %265 = vector.broadcast %264 : vector<1x1xf32> to vector<1x128xf32>
    %266 = vector.broadcast %cst_77 : f32 to vector<1x128xf32>
    %267 = arith.select %263, %265, %266 : vector<1x128xi1>, vector<1x128xf32>
    %c1_i32_78 = arith.constant 1 : i32
    %268 = vector.broadcast %c1_i32_78 : i32 to vector<1x128xi32>
    %269 = arith.cmpi eq, %261, %268 : vector<1x128xi32>
    %cst_79 = arith.constant 0.000000e+00 : f32
    %270 = vector.shape_cast %260 : vector<1x1xf32> to vector<1x1xf32>
    %271 = vector.broadcast %270 : vector<1x1xf32> to vector<1x128xf32>
    %272 = vector.broadcast %cst_79 : f32 to vector<1x128xf32>
    %273 = arith.select %269, %271, %272 : vector<1x128xi1>, vector<1x128xf32>
    %274 = arith.addf %267, %273 : vector<1x128xf32>
    %c2_i32 = arith.constant 2 : i32
    %275 = vector.broadcast %c2_i32 : i32 to vector<1x128xi32>
    %276 = arith.cmpi eq, %261, %275 : vector<1x128xi32>
    %cst_80 = arith.constant 0.000000e+00 : f32
    %277 = vector.shape_cast %228 : vector<1x1xf32> to vector<1x1xf32>
    %278 = vector.broadcast %277 : vector<1x1xf32> to vector<1x128xf32>
    %279 = vector.broadcast %cst_80 : f32 to vector<1x128xf32>
    %280 = arith.select %276, %278, %279 : vector<1x128xi1>, vector<1x128xf32>
    %281 = arith.addf %274, %280 : vector<1x128xf32>
    %282 = vector.shape_cast %281 : vector<1x128xf32> to vector<1x1x128xf32>
    %c0_81 = arith.constant 0 : index
    %c0_82 = arith.constant 0 : index
    %c0_83 = arith.constant 0 : index
    %283 = vector.load %arg6[%c0_81, %c0_82, %c0_83] : memref<1x1x128xf32, #tpu.memory_space<vmem>>, vector<1x1x128xf32>
    tpu.vector_store %arg6[%c0_81, %c0_82, %c0_83], %282 {strides = array<i32>} : memref<1x1x128xf32, #tpu.memory_space<vmem>>, vector<1x1x128xf32>,
    return
  }
  func.func @transform_0(%arg0: i32) -> (i32, i32, i32) {
    %c0_i32 = arith.constant 0 : i32
    %c0_i32_0 = arith.constant 0 : i32
    %c0_i32_1 = arith.constant 0 : i32
    return %arg0, %c0_i32, %c0_i32_0 : i32, i32, i32
  }
  func.func @transform_1(%arg0: i32) -> (i32, i32, i32) {
    %c0_i32 = arith.constant 0 : i32
    %c0_i32_0 = arith.constant 0 : i32
    %c0_i32_1 = arith.constant 0 : i32
    return %arg0, %c0_i32, %c0_i32_0 : i32, i32, i32
  }
  func.func @transform_2(%arg0: i32) -> (i32, i32) {
    %c0_i32 = arith.constant 0 : i32
    %c0_i32_0 = arith.constant 0 : i32
    %c0_i32_1 = arith.constant 0 : i32
    return %c0_i32, %c0_i32_0 : i32, i32
  }
  func.func @transform_3(%arg0: i32) -> (i32, i32, i32) {
    %c0_i32 = arith.constant 0 : i32
    %c0_i32_0 = arith.constant 0 : i32
    %c0_i32_1 = arith.constant 0 : i32
    return %arg0, %c0_i32, %c0_i32_0 : i32, i32, i32
  }
  func.func @transform_4(%arg0: i32) -> (i32, i32, i32) {
    %c0_i32 = arith.constant 0 : i32
    %c0_i32_0 = arith.constant 0 : i32
    %c0_i32_1 = arith.constant 0 : i32
    return %arg0, %c0_i32, %c0_i32_0 : i32, i32, i32
  }
  func.func @transform_5(%arg0: i32) -> (i32, i32, i32) {
    %c0_i32 = arith.constant 0 : i32
    %c0_i32_0 = arith.constant 0 : i32
    %c0_i32_1 = arith.constant 0 : i32
    return %arg0, %c0_i32, %c0_i32_0 : i32, i32, i32
  }
}

</mosaic_0001>

<llo_original>
// kernel: tpu_custom_call.1
$region0: #{tpu_custom_call.1}
  #allocation0 [shape = 'u32[]', space=smem, size = 0x4, offset = 0x4, fixed_abs, tag = 'smem constant byte address 0x4 - core index']
  #allocation1 [shape = 'u32[144,128]{1,0:T(1,128)}', space=vmem, size = 0x12000, scoped, tag = 'internal scratch']
  %s0 = inlined_call_operand.hbm [shape: f32[2,4,4], index: 0, kind: input, shape index: {}]
  %s1 = inlined_call_operand.vmem [shape: f32[2,4,1], index: 1, kind: input, shape index: {}]
  %s2 = inlined_call_operand.hbm [shape: f32[4,256], index: 2, kind: input, shape index: {}]
  %s3 = inlined_call_operand.vmem [shape: f32[2,4,256], index: 3, kind: input, shape index: {}]
  %s4 = inlined_call_operand.vmem [shape: f32[2,2,256], index: 4, kind: input, shape index: {}]
  %s5 = inlined_call_operand.hbm [shape: f32[2,1,128], index: 5, kind: output, shape index: {}]
  %s6 = sld [smem:[#allocation0]]
  $region68: #{tpu_custom_call.1} parent=0
    _
  %s8 = ssub.s32 1, %s6
  %s9 = scalar_select 0, %s8, %s6
  $region1: #{tpu_custom_call.1} parent=0
    #allocation2 [shape = 'u8[4096]{0}', space=vmem, size = 0x1000, scoped, tag = 'input window, operand 0']
    #allocation3 [shape = 's32[2]{0}', space=sflag, size = 0x8, scoped, tag = 'scoped memory for tpu_custom_call.1']
    #allocation4 [shape = 's32[2]{0}', space=sflag, size = 0x8, scoped, tag = 'scoped memory for tpu_custom_call.1']
    #allocation5 [shape = 'u8[4096]{0}', space=vmem, size = 0x1000, scoped, tag = 'input window, operand 2, single buffered']
    #allocation6 [shape = 's32[1]{0}', space=sflag, size = 0x4, scoped, tag = 'scoped memory for tpu_custom_call.1']
    #allocation7 [shape = 'u8[1024]{0}', space=vmem, size = 0x400, scoped, tag = 'output window, operand 0']
    %10 = vsyncpa [#allocation3], 0
    %s11 = scalar_lea.sflag [#allocation3], 1
    %12 = vsyncpa %s11, 0
    %13 = vsyncpa [#allocation6], 0
    %14 = vsyncpa [#allocation4], 0
    %s15 = scalar_lea.sflag [#allocation4], 1
    %16 = vsyncpa %s15, 0
    loop: start=0, step=1, limit=4
    $region2: #{tpu_custom_call.1} parent=1 // loop_pre_header
      _
    $region3: #{tpu_custom_call.1} parent=1 // loop_header
      %s18 = sphi 0, %s22
      %p19 = scmp.ge.s32.totalorder %s18, 4
      %s28 = sphi 0, %s30
      %s31 = sphi 0, %s28
      %s32 = sphi 0, %s31
      %s48 = sphi 0, %s32
      %s54 = sphi 0, %s56
      %s57 = sphi 0, %s54
      %s58 = sphi 0, %s57
      %s74 = sphi 0, %s58
      %s78 = sphi 0, %s78
      %s80 = sphi 0, %s78
      %s81 = sphi 0, %s80
      %s95 = sphi 0, %s81
      %s101 = sphi 0, %s103
      %s104 = sphi 0, %s101
      %s105 = sphi 0, %s104
      %s121 = sphi 0, %s105
      %s127 = sphi 0, %s129
      %s130 = sphi 0, %s127
      %s131 = sphi 0, %s130
      %s147 = sphi 0, %s131
      %s153 = sphi 0, %s155
      %s156 = sphi 0, %s153
      %s157 = sphi 0, %s156
      %s173 = sphi 0, %s157
    $region4: #{tpu_custom_call.1} parent=1 // loop_header_branch
      %21 = sbr.rel (%p19) target = $region8
    $region5: #{tpu_custom_call.1} parent=1 // loop_body
      %s23 = ssub.s32 %s18, 1
      %s24 = ssub.s32 %s18, 2
      %s25 = sadd.s32 %s18, 1
      %s26 = ssub.s32 %s18, %s25
      %p27 = scmp.eq.s32.totalorder %s26, 0
      %s29 = sadd.s32 %s28, 1
      %s30 = scalar_select %p27, %s28, %s29
      %p33 = pneg %p27
      %p34 = scmp.eq.s32.totalorder %s18, 1
      %p35 = por %p33, %p34
      %p36 = scmp.ne.s32.totalorder %s28, %s31
      %p37 = scmp.eq.s32.totalorder %s18, 0
      %p38 = por %p36, %p37
      %p39 = scmp.ne.s32.totalorder %s28, %s31
      %p40 = scmp.eq.s32.totalorder %s23, 1
      %p41 = por %p39, %p40
      %p42 = scmp.ne.s32.totalorder %s31, %s32
      %p43 = scmp.eq.s32.totalorder %s23, 0
      %p44 = por %p42, %p43
      %p45 = scmp.ne.s32.totalorder %s31, %s32
      %p46 = scmp.eq.s32.totalorder %s24, 1
      %p47 = por %p45, %p46
      %p49 = scmp.ne.s32.totalorder %s32, %s48
      %p50 = scmp.eq.s32.totalorder %s24, 0
      %p51 = por %p49, %p50
      %s52 = ssub.s32 %s18, %s25
      %p53 = scmp.eq.s32.totalorder %s52, 0
      %s55 = sadd.s32 %s54, 1
      %s56 = scalar_select %p53, %s54, %s55
      %p59 = pneg %p53
      %p60 = scmp.eq.s32.totalorder %s18, 1
      %p61 = por %p59, %p60
      %p62 = scmp.ne.s32.totalorder %s54, %s57
      %p63 = scmp.eq.s32.totalorder %s18, 0
      %p64 = por %p62, %p63
      %p65 = scmp.ne.s32.totalorder %s54, %s57
      %p66 = scmp.eq.s32.totalorder %s23, 1
      %p67 = por %p65, %p66
      %p68 = scmp.ne.s32.totalorder %s57, %s58
      %p69 = scmp.eq.s32.totalorder %s23, 0
      %p70 = por %p68, %p69
      %p71 = scmp.ne.s32.totalorder %s57, %s58
      %p72 = scmp.eq.s32.totalorder %s24, 1
      %p73 = por %p71, %p72
      %p75 = scmp.ne.s32.totalorder %s58, %s74
      %p76 = scmp.eq.s32.totalorder %s24, 0
      %p77 = por %p75, %p76
      %s79 = sadd.s32 %s78, 1
      %p82 = scmp.eq.s32.totalorder %s18, 1
      %p83 = scmp.ne.s32.totalorder %s78, %s80
      %p84 = scmp.eq.s32.totalorder %s18, 0
      %p85 = por %p83, %p84
      %p86 = scmp.ne.s32.totalorder %s78, %s80
      %p87 = scmp.eq.s32.totalorder %s23, 1
      %p88 = por %p86, %p87
      %p89 = scmp.ne.s32.totalorder %s80, %s81
      %p90 = scmp.eq.s32.totalorder %s23, 0
      %p91 = por %p89, %p90
      %p92 = scmp.ne.s32.totalorder %s80, %s81
      %p93 = scmp.eq.s32.totalorder %s24, 1
      %p94 = por %p92, %p93
      %p96 = scmp.ne.s32.totalorder %s81, %s95
      %p97 = scmp.eq.s32.totalorder %s24, 0
      %p98 = por %p96, %p97
      %s99 = ssub.s32 %s18, %s25
      %p100 = scmp.eq.s32.totalorder %s99, 0
      %s102 = sadd.s32 %s101, 1
      %s103 = scalar_select %p100, %s101, %s102
      %p106 = pneg %p100
      %p107 = scmp.eq.s32.totalorder %s18, 1
      %p108 = por %p106, %p107
      %p109 = scmp.ne.s32.totalorder %s101, %s104
      %p110 = scmp.eq.s32.totalorder %s18, 0
      %p111 = por %p109, %p110
      %p112 = scmp.ne.s32.totalorder %s101, %s104
      %p113 = scmp.eq.s32.totalorder %s23, 1
      %p114 = por %p112, %p113
      %p115 = scmp.ne.s32.totalorder %s104, %s105
      %p116 = scmp.eq.s32.totalorder %s23, 0
      %p117 = por %p115, %p116
      %p118 = scmp.ne.s32.totalorder %s104, %s105
      %p119 = scmp.eq.s32.totalorder %s24, 1
      %p120 = por %p118, %p119
      %p122 = scmp.ne.s32.totalorder %s105, %s121
      %p123 = scmp.eq.s32.totalorder %s24, 0
      %p124 = por %p122, %p123
      %s125 = ssub.s32 %s18, %s25
      %p126 = scmp.eq.s32.totalorder %s125, 0
      %s128 = sadd.s32 %s127, 1
      %s129 = scalar_select %p126, %s127, %s128
      %p132 = pneg %p126
      %p133 = scmp.eq.s32.totalorder %s18, 1
      %p134 = por %p132, %p133
      %p135 = scmp.ne.s32.totalorder %s127, %s130
      %p136 = scmp.eq.s32.totalorder %s18, 0
      %p137 = por %p135, %p136
      %p138 = scmp.ne.s32.totalorder %s127, %s130
      %p139 = scmp.eq.s32.totalorder %s23, 1
      %p140 = por %p138, %p139
      %p141 = scmp.ne.s32.totalorder %s130, %s131
      %p142 = scmp.eq.s32.totalorder %s23, 0
      %p143 = por %p141, %p142
      %p144 = scmp.ne.s32.totalorder %s130, %s131
      %p145 = scmp.eq.s32.totalorder %s24, 1
      %p146 = por %p144, %p145
      %p148 = scmp.ne.s32.totalorder %s131, %s147
      %p149 = scmp.eq.s32.totalorder %s24, 0
      %p150 = por %p148, %p149
      %s151 = ssub.s32 %s18, %s25
      %p152 = scmp.eq.s32.totalorder %s151, 0
      %s154 = sadd.s32 %s153, 1
      %s155 = scalar_select %p152, %s153, %s154
      %p158 = pneg %p152
      %p159 = scmp.eq.s32.totalorder %s18, 1
      %p160 = por %p158, %p159
      %p161 = scmp.ne.s32.totalorder %s153, %s156
      %p162 = scmp.eq.s32.totalorder %s18, 0
      %p163 = por %p161, %p162
      %p164 = scmp.ne.s32.totalorder %s153, %s156
      %p165 = scmp.eq.s32.totalorder %s23, 1
      %p166 = por %p164, %p165
      %p167 = scmp.ne.s32.totalorder %s156, %s157
      %p168 = scmp.eq.s32.totalorder %s23, 0
      %p169 = por %p167, %p168
      %p170 = scmp.ne.s32.totalorder %s156, %s157
      %p171 = scmp.eq.s32.totalorder %s24, 1
      %p172 = por %p170, %p171
      %p174 = scmp.ne.s32.totalorder %s157, %s173
      %p175 = scmp.eq.s32.totalorder %s24, 0
      %p176 = por %p174, %p175
      %p177 = scmp.le.s32.totalorder 1, %s18
      %p178 = scmp.lt.s32.totalorder %s18, 3
      %p179 = pnand %p177, %p178
      %p180 = pneg %p179
      // Predicated region
      $region9: #{tpu_custom_call.1} parent=5 // pred_check
        _
      $region10: #{tpu_custom_call.1} parent=5 // pred_check_branch
        %182 = sbr.rel (%p179) target = $region12
      $region11: #{tpu_custom_call.1} parent=5 // pred_region
        %s183 = ssub.s32 %s18, 1
        // Predicated region
        $region13: #{tpu_custom_call.1} parent=11 // pred_check
          %p184 = pneg %p91
        $region14: #{tpu_custom_call.1} parent=11 // pred_check_branch
          %186 = sbr.rel (%p184) target = $region16
        $region15: #{tpu_custom_call.1} parent=11 // pred_region
          %s188 = ssub.s32 128, 128
          %189 = vsyncadd [#allocation6], %s188
          %s191 = sshll.u32 [#allocation5], 4
          %s192 = int_to_ptr.vmem [resolvable:$true] %s191
          %194 = dma.hbm_to_vmem [thread:$0]  %s2, 128, %s192, [#allocation6]
        $region16: #{tpu_custom_call.1} parent=11 // pred_fallthru
          _
      $region12: #{tpu_custom_call.1} parent=5 // pred_fallthru
        _
      %p195 = scmp.lt.s32.totalorder %s18, 2
      // Predicated region
      $region17: #{tpu_custom_call.1} parent=5 // pred_check
        %p196 = pneg %p195
      $region18: #{tpu_custom_call.1} parent=5 // pred_check_branch
        %198 = sbr.rel (%p196) target = $region20
      $region19: #{tpu_custom_call.1} parent=5 // pred_region
        // Predicated region
        $region21: #{tpu_custom_call.1} parent=19 // pred_check
          %p199 = pneg %p38
        $region22: #{tpu_custom_call.1} parent=19 // pred_check_branch
          %201 = sbr.rel (%p199) target = $region24
        $region23: #{tpu_custom_call.1} parent=19 // pred_region
          %s202 = sand.u32 %s28, 1
          %s203 = scalar_lea.sflag [#allocation3], %s202
          %s204 = sand.u32 %s28, 1
          %s205 = smul.addr %s204, 4
          %s206 = scalar_lea.vmem [#allocation2], %s205
          %s208 = ssub.s32 64, 64
          %209 = vsyncadd %s203, %s208
          %s210 = smul.addr %s18, 64
          %s211 = scalar_lea.hbm %s0, %s210
          %s213 = sshll.u32 %s206, 4
          %s214 = int_to_ptr.vmem [resolvable:$true] %s213
          %216 = dma.hbm_to_vmem [thread:$0]  %s211, 64, %s214, %s203
        $region24: #{tpu_custom_call.1} parent=19 // pred_fallthru
          _
        // Predicated region
        $region25: #{tpu_custom_call.1} parent=19 // pred_check
          %p217 = pneg %p64
        $region26: #{tpu_custom_call.1} parent=19 // pred_check_branch
          %219 = sbr.rel (%p217) target = $region28
        $region27: #{tpu_custom_call.1} parent=19 // pred_region
          %p220 = scmp.lt.s32.totalorder %s18, 1
          %s221 = scalar_select %p220, %s18, 1
          %s222 = smul.addr %s221, 4
          %s223 = scalar_lea.vmem %s1, %s222
        $region28: #{tpu_custom_call.1} parent=19 // pred_fallthru
          _
        // Predicated region
        $region29: #{tpu_custom_call.1} parent=19 // pred_check
          %p224 = pneg %p111
        $region30: #{tpu_custom_call.1} parent=19 // pred_check_branch
          %226 = sbr.rel (%p224) target = $region32
        $region31: #{tpu_custom_call.1} parent=19 // pred_region
          %p227 = scmp.lt.s32.totalorder %s18, 1
          %s228 = scalar_select %p227, %s18, 1
          %s229 = smul.addr %s228, 2
          %s230 = smul.addr %s229, 4
          %s231 = scalar_lea.vmem %s3, %s230
        $region32: #{tpu_custom_call.1} parent=19 // pred_fallthru
          _
        // Predicated region
        $region33: #{tpu_custom_call.1} parent=19 // pred_check
          %p232 = pneg %p137
        $region34: #{tpu_custom_call.1} parent=19 // pred_check_branch
          %234 = sbr.rel (%p232) target = $region36
        $region35: #{tpu_custom_call.1} parent=19 // pred_region
          %p235 = scmp.lt.s32.totalorder %s18, 1
          %s236 = scalar_select %p235, %s18, 1
          %s237 = smul.addr %s236, 2
          %s238 = smul.addr %s237, 2
          %s239 = scalar_lea.vmem %s4, %s238
        $region36: #{tpu_custom_call.1} parent=19 // pred_fallthru
          _
      $region20: #{tpu_custom_call.1} parent=5 // pred_fallthru
        _
      %p240 = scmp.le.s32.totalorder 1, %s18
      %p241 = scmp.lt.s32.totalorder %s18, 3
      %p242 = pnand %p240, %p241
      %p243 = pneg %p242
      // Predicated region
      $region37: #{tpu_custom_call.1} parent=5 // pred_check
        _
      $region38: #{tpu_custom_call.1} parent=5 // pred_check_branch
        %245 = sbr.rel (%p242) target = $region40
      $region39: #{tpu_custom_call.1} parent=5 // pred_region
        %s246 = ssub.s32 %s18, 1
        %s247 = sand.u32 %s31, 1
        %s248 = scalar_lea.sflag [#allocation3], %s247
        %s249 = sand.u32 %s31, 1
        %s250 = smul.addr %s249, 4
        %s251 = scalar_lea.vmem [#allocation2], %s250
        // Predicated region
        $region41: #{tpu_custom_call.1} parent=39 // pred_check
          %p252 = pneg %p44
        $region42: #{tpu_custom_call.1} parent=39 // pred_check_branch
          %254 = sbr.rel (%p252) target = $region44
        $region43: #{tpu_custom_call.1} parent=39 // pred_region
          %255 = dma.done %s248, 64
        $region44: #{tpu_custom_call.1} parent=39 // pred_fallthru
          _
        // Predicated region
        $region45: #{tpu_custom_call.1} parent=39 // pred_check
          %p256 = pneg %p91
        $region46: #{tpu_custom_call.1} parent=39 // pred_check_branch
          %258 = sbr.rel (%p256) target = $region48
        $region47: #{tpu_custom_call.1} parent=39 // pred_region
          %259 = dma.done [#allocation6], 128
        $region48: #{tpu_custom_call.1} parent=39 // pred_fallthru
          _
        %s260 = sand.u32 %s31, 1
        %s261 = scalar_lea.sflag [#allocation3], %s260
        %s262 = sand.u32 %s31, 1
        %s263 = smul.addr %s262, 4
        %s264 = scalar_lea.vmem [#allocation2], %s263
        %p265 = pneg %p44
        %p266 = pneg %p41
        %p267 = scmp.lt.s32.totalorder %s23, 1
        %s268 = scalar_select %p267, %s23, 1
        %s269 = smul.addr %s268, 4
        %s270 = scalar_lea.vmem %s1, %s269
        %p271 = pneg %p70
        %p272 = pneg %p67
        %p273 = pneg %p91
        %p274 = pneg %p88
        %p275 = scmp.lt.s32.totalorder %s23, 1
        %s276 = scalar_select %p275, %s23, 1
        %s277 = smul.addr %s276, 2
        %s278 = smul.addr %s277, 4
        %s279 = scalar_lea.vmem %s3, %s278
        %p280 = pneg %p117
        %p281 = pneg %p114
        %p282 = scmp.lt.s32.totalorder %s23, 1
        %s283 = scalar_select %p282, %s23, 1
        %s284 = smul.addr %s283, 2
        %s285 = smul.addr %s284, 2
        %s286 = scalar_lea.vmem %s4, %s285
        %p287 = pneg %p143
        %p288 = pneg %p140
        %p289 = pneg %p169
        %p290 = pneg %p166
        %s291 = sand.u32 %s156, 1
        %s292 = scalar_lea.sflag [#allocation4], %s291
        %s293 = sand.u32 %s156, 1
        %s294 = scalar_lea.vmem [#allocation7], %s293
        %p295 = scmp.lt.s32.totalorder %s23, 1
        %s296 = scalar_select %p295, %s23, 1
        %s297 = smul.addr %s296, 4
        %s298 = scalar_lea.vmem %s1, %s297
        %p299 = scmp.lt.s32.totalorder %s23, 1
        %s300 = scalar_select %p299, %s23, 1
        %s301 = smul.addr %s300, 2
        %s302 = smul.addr %s301, 4
        %s303 = scalar_lea.vmem %s3, %s302
        %p304 = scmp.lt.s32.totalorder %s23, 1
        %s305 = scalar_select %p304, %s23, 1
        %s306 = smul.addr %s305, 2
        %s307 = smul.addr %s306, 2
        %s308 = scalar_lea.vmem %s4, %s307
        %v309 = vld [vmem:[%s251] sm:$0xf]
        %v310 = vld [vmem:[%s298] sm:$0xf]
        %v311 = vld [vmem:[#allocation5] sm:$0xff]
        %v312 = vld [vmem:[%s303] sm:$0xff]
        %v313 = vld [vmem:[%s308] sm:$0xf]
        %v314 = vmul.f32 %v311, 0.5
        %v316 = vrot.slane %v314, 6
        %v317 = vrot.slane %v316, 4
        %v319 = vsub.f32 %v311, %v317
        %v320 = vadd.f32 %v311, %v317
        %v322 = vlaneseq
        %v323 = vshrl.u32 %v322, 7
        %v324 = vsub.s32 0, %v323
        %v325 = vrot.slane %v319, %v324
        %v326 = vlaneseq
        %v327 = vshrl.u32 %v326, 7
        %v328 = vsub.s32 4, %v327
        %v329 = vrot.slane %v319, %v328
        %v332 = vlaneseq
        %v333 = vshrl.u32 %v332, 7
        %v334 = vsub.s32 0, %v333
        %v335 = vrot.slane %v325, %v334
        %v336 = vlaneseq
        %v337 = vshrl.u32 %v336, 7
        %v338 = vsub.s32 0, %v337
        %v339 = vrot.slane %v329, %v338
        %341 = vset.pattern.permute.xlu0 0
        %342 = vperm.xlu0 %341, %v309
        %v343 = vpop.permute.xlu0 %342
        %v345 = vmax.f32 %v335, %v343
        %v346 = vmax.f32 %v339, %v343
        %v347 = vlaneseq
        %v348 = vshrl.u32 %v347, 7
        %v349 = vsub.s32 1, %v348
        %v350 = vrot.slane %v319, %v349
        %v351 = vlaneseq
        %v352 = vshrl.u32 %v351, 7
        %v353 = vsub.s32 5, %v352
        %v354 = vrot.slane %v319, %v353
        %v357 = vlaneseq
        %v358 = vshrl.u32 %v357, 7
        %v359 = vsub.s32 1, %v358
        %v360 = vrot.slane %v350, %v359
        %v361 = vlaneseq
        %v362 = vshrl.u32 %v361, 7
        %v363 = vsub.s32 1, %v362
        %v364 = vrot.slane %v354, %v363
        %365 = vset.pattern.permute.xlu0 1
        %366 = vperm.xlu0 %365, %v309
        %v367 = vpop.permute.xlu0 %366
        %v369 = vmax.f32 %v360, %v367
        %v370 = vmax.f32 %v364, %v367
        %v372 = vlaneseq
        %v373 = vshrl.u32 %v372, 7
        %v374 = vsub.s32 0, %v373
        %v375 = vrot.slane %v320, %v374
        %v376 = vlaneseq
        %v377 = vshrl.u32 %v376, 7
        %v378 = vsub.s32 4, %v377
        %v379 = vrot.slane %v320, %v378
        %v382 = vlaneseq
        %v383 = vshrl.u32 %v382, 7
        %v384 = vsub.s32 0, %v383
        %v385 = vrot.slane %v375, %v384
        %v386 = vlaneseq
        %v387 = vshrl.u32 %v386, 7
        %v388 = vsub.s32 0, %v387
        %v389 = vrot.slane %v379, %v388
        %390 = vset.pattern.permute.xlu0 2
        %391 = vperm.xlu0 %390, %v309
        %v392 = vpop.permute.xlu0 %391
        %v394 = vmin.f32 %v385, %v392
        %v395 = vmin.f32 %v389, %v392
        %v396 = vlaneseq
        %v397 = vshrl.u32 %v396, 7
        %v398 = vsub.s32 1, %v397
        %v399 = vrot.slane %v320, %v398
        %v400 = vlaneseq
        %v401 = vshrl.u32 %v400, 7
        %v402 = vsub.s32 5, %v401
        %v403 = vrot.slane %v320, %v402
        %v406 = vlaneseq
        %v407 = vshrl.u32 %v406, 7
        %v408 = vsub.s32 1, %v407
        %v409 = vrot.slane %v399, %v408
        %v410 = vlaneseq
        %v411 = vshrl.u32 %v410, 7
        %v412 = vsub.s32 1, %v411
        %v413 = vrot.slane %v403, %v412
        %414 = vset.pattern.permute.xlu0 3
        %415 = vperm.xlu0 %414, %v309
        %v416 = vpop.permute.xlu0 %415
        %v418 = vmin.f32 %v409, %v416
        %v419 = vmin.f32 %v413, %v416
        %v420 = vsub.f32 %v394, %v345
        %v421 = vsub.f32 %v395, %v346
        %v422 = vmax.f32 %v420, 0.0
        %v423 = vmax.f32 %v421, 0.0
        %v424 = vsub.f32 %v418, %v369
        %v425 = vsub.f32 %v419, %v370
        %v426 = vmax.f32 %v424, 0.0
        %v427 = vmax.f32 %v425, 0.0
        %v428 = vmul.f32 %v422, %v426
        %v429 = vmul.f32 %v423, %v427
        %v430 = vsub.f32 %v320, %v319
        %v432 = vrot.slane %v430, 5
        %v433 = vrot.slane %v432, 4
        %v435 = vmul.f32 %v430, %v433
        %436 = vrot.lane.b32.xlu0 %v309, 2
        %v437 = vpop.permute.xlu0 %436
        %v439 = vsub.f32 %v309, %v437
        %441 = vrot.lane.b32.xlu0 %v439, 127
        %v442 = vpop.permute.xlu0 %441
        %v444 = vmul.f32 %v439, %v442
        %v446 = vlaneseq
        %v447 = vshrl.u32 %v446, 7
        %v448 = vsub.s32 0, %v447
        %v449 = vrot.slane %v435, %v448
        %v450 = vlaneseq
        %v451 = vshrl.u32 %v450, 7
        %v452 = vsub.s32 4, %v451
        %v453 = vrot.slane %v435, %v452
        %v456 = vlaneseq
        %v457 = vshrl.u32 %v456, 7
        %v458 = vsub.s32 0, %v457
        %v459 = vrot.slane %v449, %v458
        %v460 = vlaneseq
        %v461 = vshrl.u32 %v460, 7
        %v462 = vsub.s32 0, %v461
        %v463 = vrot.slane %v453, %v462
        %465 = vset.pattern.permute.xlu0 2
        %466 = vperm.xlu0 %465, %v444
        %v467 = vpop.permute.xlu0 %466
        %v469 = vadd.f32 %v459, %v467
        %v470 = vadd.f32 %v463, %v467
        %v471 = vsub.f32 %v469, %v428
        %v472 = vsub.f32 %v470, %v429
        %v473 = vrcp.pop %v471
        %v474 = vmul.f32 %v428, %v473
        %v475 = vrcp.pop %v472
        %v476 = vmul.f32 %v429, %v475
        %v477 = vlaneseq
        %v478 = vshrl.u32 %v477, 7
        %v479 = vlaneseq
        %v480 = vand.u32 %v479, 127
        %v481 = vadd.s32 %v480, 128
        %vm482 = vcmask 1043456
        %v483 = vsel %vm482, %v474, -inf
        %v484 = vrot.slane %v483, 4
        %v485 = vmax.f32 %v483, %v484
        %v486 = vrot.slane %v485, 2
        %v487 = vmax.f32 %v485, %v486
        %v488 = vrot.slane %v487, 1
        %v489 = vmax.f32 %v487, %v488
        %v490 = vsel %vm482, %v476, -inf
        %v491 = vrot.slane %v490, 4
        %v492 = vmax.f32 %v490, %v491
        %v493 = vrot.slane %v492, 2
        %v494 = vmax.f32 %v492, %v493
        %v495 = vrot.slane %v494, 1
        %v496 = vmax.f32 %v494, %v495
        %vm497 = vcmp.ge.f32.partialorder %v474, %v489
        %vm498 = vcmp.ge.f32.partialorder %v476, %v496
        %v499 = vsel %vm497, %v478, 4
        %v500 = vsel %vm498, %v478, 4
        %v501 = vsel %vm482, %v499, 2147483647
        %v502 = vrot.slane %v501, 4
        %vm503 = vcmp.lt.s32.totalorder %v501, %v502
        %v504 = vsel %vm503, %v501, %v502
        %v505 = vrot.slane %v504, 2
        %vm506 = vcmp.lt.s32.totalorder %v504, %v505
        %v507 = vsel %vm506, %v504, %v505
        %v508 = vrot.slane %v507, 1
        %vm509 = vcmp.lt.s32.totalorder %v507, %v508
        %v510 = vsel %vm509, %v507, %v508
        %v511 = vsel %vm482, %v500, 2147483647
        %v512 = vrot.slane %v511, 4
        %vm513 = vcmp.lt.s32.totalorder %v511, %v512
        %v514 = vsel %vm513, %v511, %v512
        %v515 = vrot.slane %v514, 2
        %vm516 = vcmp.lt.s32.totalorder %v514, %v515
        %v517 = vsel %vm516, %v514, %v515
        %v518 = vrot.slane %v517, 1
        %vm519 = vcmp.lt.s32.totalorder %v517, %v518
        %v520 = vsel %vm519, %v517, %v518
        %v521 = vmax.f32 %v483, %v490
        %522 = vmax.xlane.f32.xlu0 %v521
        %v523 = vpop.xlane.xlu0 %522
        %vm524 = vcmp.ge.f32.partialorder %v474, %v523
        %vm525 = vcmp.ge.f32.partialorder %v476, %v523
        %v526 = vsel %vm524, %v480, 256
        %v527 = vsel %vm525, %v481, 256
        %v528 = vsel %vm482, %v526, 2147483647
        %v529 = vsel %vm482, %v527, 2147483647
        %vm530 = vcmp.lt.s32.totalorder %v528, %v529
        %v531 = vsel %vm530, %v528, %v529
        %v532 = vand.u32 %v531, 65535
        %v533 = vshra.s32 %v531, 16
        %v534 = vcvt.s32.f32 %v532
        %v535 = vcvt.s32.f32 %v533
        %536 = vmin.xlane.f32.xlu0 %v535
        %v537 = vpop.xlane.xlu0 %536
        %vm538 = vcmp.eq.f32.partialorder %v535, %v537
        %v539 = vsel %vm538, %v534, inf
        %540 = vmin.xlane.f32.xlu0 %v539
        %v541 = vpop.xlane.xlu0 %540
        %v542 = vcvt.f32.s32 %v541
        %v543 = vcvt.f32.s32 %v537
        %v544 = vshll.u32 %v543, 16
        %v545 = vadd.s32 %v544, %v542
        %vm546 = vcmp.eq.s32.totalorder %v480, %v545
        %vm547 = vcmp.eq.s32.totalorder %v481, %v545
        %v548 = vsel %vm546, %v478, 4294967295
        %v549 = vsel %vm547, %v478, 4294967295
        %v550 = vsel %vm482, %v548, 2147483648
        %v551 = vrot.slane %v550, 4
        %vm552 = vcmp.gt.s32.totalorder %v550, %v551
        %v553 = vsel %vm552, %v550, %v551
        %v554 = vrot.slane %v553, 2
        %vm555 = vcmp.gt.s32.totalorder %v553, %v554
        %v556 = vsel %vm555, %v553, %v554
        %v557 = vrot.slane %v556, 1
        %vm558 = vcmp.gt.s32.totalorder %v556, %v557
        %v559 = vsel %vm558, %v556, %v557
        %v560 = vsel %vm482, %v549, 2147483648
        %v561 = vrot.slane %v560, 4
        %vm562 = vcmp.gt.s32.totalorder %v560, %v561
        %v563 = vsel %vm562, %v560, %v561
        %v564 = vrot.slane %v563, 2
        %vm565 = vcmp.gt.s32.totalorder %v563, %v564
        %v566 = vsel %vm565, %v563, %v564
        %v567 = vrot.slane %v566, 1
        %vm568 = vcmp.gt.s32.totalorder %v566, %v567
        %v569 = vsel %vm568, %v566, %v567
        %vm570 = vcmp.ge.s32.totalorder %v559, 0
        %vm571 = vcmp.ge.s32.totalorder %v569, 0
        %v572 = vsel %vm570, 2.0, %v489
        %v573 = vsel %vm571, 2.0, %v496
        %v574 = vsel %vm570, %v559, %v510
        %v575 = vsel %vm571, %v569, %v520
        %vm576 = vcmp.eq.s32.totalorder %v574, %v478
        %vm577 = vcmp.eq.s32.totalorder %v575, %v478
        %v578 = vsel %vm576, %v343, 0.0
        %v579 = vsel %vm577, %v343, 0.0
        %v580 = vsel %vm482, %v578, 0.0
        %v581 = vrot.slane %v580, 4
        %v582 = vadd.f32 %v580, %v581
        %v583 = vrot.slane %v582, 2
        %v584 = vadd.f32 %v582, %v583
        %v585 = vrot.slane %v584, 1
        %v586 = vadd.f32 %v584, %v585
        %v587 = vsel %vm482, %v579, 0.0
        %v588 = vrot.slane %v587, 4
        %v589 = vadd.f32 %v587, %v588
        %v590 = vrot.slane %v589, 2
        %v591 = vadd.f32 %v589, %v590
        %v592 = vrot.slane %v591, 1
        %v593 = vadd.f32 %v591, %v592
        %v594 = vsel %vm576, %v367, 0.0
        %v595 = vsel %vm577, %v367, 0.0
        %v596 = vsel %vm482, %v594, 0.0
        %v597 = vrot.slane %v596, 4
        %v598 = vadd.f32 %v596, %v597
        %v599 = vrot.slane %v598, 2
        %v600 = vadd.f32 %v598, %v599
        %v601 = vrot.slane %v600, 1
        %v602 = vadd.f32 %v600, %v601
        %v603 = vsel %vm482, %v595, 0.0
        %v604 = vrot.slane %v603, 4
        %v605 = vadd.f32 %v603, %v604
        %v606 = vrot.slane %v605, 2
        %v607 = vadd.f32 %v605, %v606
        %v608 = vrot.slane %v607, 1
        %v609 = vadd.f32 %v607, %v608
        %v610 = vsel %vm576, %v392, 0.0
        %v611 = vsel %vm577, %v392, 0.0
        %v612 = vsel %vm482, %v610, 0.0
        %v613 = vrot.slane %v612, 4
        %v614 = vadd.f32 %v612, %v613
        %v615 = vrot.slane %v614, 2
        %v616 = vadd.f32 %v614, %v615
        %v617 = vrot.slane %v616, 1
        %v618 = vadd.f32 %v616, %v617
        %v619 = vsel %vm482, %v611, 0.0
        %v620 = vrot.slane %v619, 4
        %v621 = vadd.f32 %v619, %v620
        %v622 = vrot.slane %v621, 2
        %v623 = vadd.f32 %v621, %v622
        %v624 = vrot.slane %v623, 1
        %v625 = vadd.f32 %v623, %v624
        %v626 = vsel %vm576, %v416, 0.0
        %v627 = vsel %vm577, %v416, 0.0
        %v628 = vsel %vm482, %v626, 0.0
        %v629 = vrot.slane %v628, 4
        %v630 = vadd.f32 %v628, %v629
        %v631 = vrot.slane %v630, 2
        %v632 = vadd.f32 %v630, %v631
        %v633 = vrot.slane %v632, 1
        %v634 = vadd.f32 %v632, %v633
        %v635 = vsel %vm482, %v627, 0.0
        %v636 = vrot.slane %v635, 4
        %v637 = vadd.f32 %v635, %v636
        %v638 = vrot.slane %v637, 2
        %v639 = vadd.f32 %v637, %v638
        %v640 = vrot.slane %v639, 1
        %v641 = vadd.f32 %v639, %v640
        %643 = vset.pattern.permute.xlu0 0
        %644 = vperm.xlu0 %643, %v310
        %v645 = vpop.permute.xlu0 %644
        %v647 = vsel %vm576, %v645, 0.0
        %v648 = vsel %vm577, %v645, 0.0
        %v649 = vsel %vm482, %v647, 0.0
        %v650 = vrot.slane %v649, 4
        %v651 = vadd.f32 %v649, %v650
        %v652 = vrot.slane %v651, 2
        %v653 = vadd.f32 %v651, %v652
        %v654 = vrot.slane %v653, 1
        %v655 = vadd.f32 %v653, %v654
        %v656 = vsel %vm482, %v648, 0.0
        %v657 = vrot.slane %v656, 4
        %v658 = vadd.f32 %v656, %v657
        %v659 = vrot.slane %v658, 2
        %v660 = vadd.f32 %v658, %v659
        %v661 = vrot.slane %v660, 1
        %v662 = vadd.f32 %v660, %v661
        %vm663 = vcmp.lt.f32.partialorder %v572, 0.35
        %vm664 = vcmp.lt.f32.partialorder %v573, 0.35
        %v665 = vadd.f32 %v655, 1.0
        %v666 = vadd.f32 %v662, 1.0
        %v667 = vsel %vm663, 0.0, %v665
        %v668 = vsel %vm664, 0.0, %v666
        %v669 = vcvt.f32.s32.to.zero.pseudo %v667
        %v670 = vcvt.f32.s32.to.zero.pseudo %v668
        %vm671 = vcmp.gt.s32.totalorder %v669, 0
        %vm672 = vcmp.gt.s32.totalorder %v670, 0
        %v673 = vadd.f32 %v586, %v618
        %v674 = vadd.f32 %v593, %v625
        %v675 = vmul.f32 %v673, 0.5
        %v676 = vmul.f32 %v674, 0.5
        %v678 = vlaneseq
        %v679 = vshrl.u32 %v678, 7
        %v680 = vsub.s32 0, %v679
        %v681 = vrot.slane %v311, %v680
        %v682 = vlaneseq
        %v683 = vshrl.u32 %v682, 7
        %v684 = vsub.s32 4, %v683
        %v685 = vrot.slane %v311, %v684
        %v688 = vsub.f32 %v675, %v681
        %v689 = vsub.f32 %v676, %v685
        %v690 = vmul.f32 %v311, 0.1
        %v692 = vlaneseq
        %v693 = vshrl.u32 %v692, 7
        %v694 = vsub.s32 2, %v693
        %v695 = vrot.slane %v690, %v694
        %v696 = vlaneseq
        %v697 = vshrl.u32 %v696, 7
        %v698 = vsub.s32 6, %v697
        %v699 = vrot.slane %v690, %v698
        %v702 = vrcp.pop %v695
        %v703 = vmul.f32 %v688, %v702
        %v704 = vrcp.pop %v699
        %v705 = vmul.f32 %v689, %v704
        %v706 = vadd.f32 %v602, %v634
        %v707 = vadd.f32 %v609, %v641
        %v708 = vmul.f32 %v706, 0.5
        %v709 = vmul.f32 %v707, 0.5
        %v710 = vlaneseq
        %v711 = vshrl.u32 %v710, 7
        %v712 = vsub.s32 1, %v711
        %v713 = vrot.slane %v311, %v712
        %v714 = vlaneseq
        %v715 = vshrl.u32 %v714, 7
        %v716 = vsub.s32 5, %v715
        %v717 = vrot.slane %v311, %v716
        %v720 = vsub.f32 %v708, %v713
        %v721 = vsub.f32 %v709, %v717
        %v722 = vlaneseq
        %v723 = vshrl.u32 %v722, 7
        %v724 = vsub.s32 3, %v723
        %v725 = vrot.slane %v690, %v724
        %v726 = vlaneseq
        %v727 = vshrl.u32 %v726, 7
        %v728 = vsub.s32 7, %v727
        %v729 = vrot.slane %v690, %v728
        %v732 = vrcp.pop %v725
        %v733 = vmul.f32 %v720, %v732
        %v734 = vrcp.pop %v729
        %v735 = vmul.f32 %v721, %v734
        %v736 = vsub.f32 %v618, %v586
        %v737 = vsub.f32 %v625, %v593
        %v738 = vlaneseq
        %v739 = vshrl.u32 %v738, 7
        %v740 = vsub.s32 2, %v739
        %v741 = vrot.slane %v311, %v740
        %v742 = vlaneseq
        %v743 = vshrl.u32 %v742, 7
        %v744 = vsub.s32 6, %v743
        %v745 = vrot.slane %v311, %v744
        %v748 = vrcp.pop %v741
        %v749 = vmul.f32 %v736, %v748
        %v750 = vrcp.pop %v745
        %v751 = vmul.f32 %v737, %v750
        %v752 = vlog2.pop %v749
        %v753 = vmul.f32 %v752, 0.6931472
        %v754 = vlog2.pop %v751
        %v755 = vmul.f32 %v754, 0.6931472
        %v756 = vrcp.pop 0.2
        %v757 = vmul.f32 %v753, %v756
        %v758 = vmul.f32 %v755, %v756
        %v759 = vsub.f32 %v634, %v602
        %v760 = vsub.f32 %v641, %v609
        %v761 = vlaneseq
        %v762 = vshrl.u32 %v761, 7
        %v763 = vsub.s32 3, %v762
        %v764 = vrot.slane %v311, %v763
        %v765 = vlaneseq
        %v766 = vshrl.u32 %v765, 7
        %v767 = vsub.s32 7, %v766
        %v768 = vrot.slane %v311, %v767
        %v771 = vrcp.pop %v764
        %v772 = vmul.f32 %v759, %v771
        %v773 = vrcp.pop %v768
        %v774 = vmul.f32 %v760, %v773
        %v775 = vlog2.pop %v772
        %v776 = vmul.f32 %v775, 0.6931472
        %v777 = vlog2.pop %v774
        %v778 = vmul.f32 %v777, 0.6931472
        %v779 = vmul.f32 %v776, %v756
        %v780 = vmul.f32 %v778, %v756
        %v783 = vcombine.low %v703, %v705
        %v785 = vsub.f32 %v312, %v783
        %v786 = vand.u32 2147483647, %v785
        %vm787 = vcmp.lt.f32.partialorder %v786, 1.0
        %v788 = vmul.f32 %v785, 0.5
        %v789 = vmul.f32 %v788, %v785
        %v790 = vsub.f32 %v786, 0.5
        %v791 = vsel %vm787, %v789, %v790
        %v794 = vcombine.low %v733, %v735
        %v795 = vrot.slane %v794, 7
        %v797 = vsub.f32 %v312, %v795
        %v798 = vand.u32 2147483647, %v797
        %vm799 = vcmp.lt.f32.partialorder %v798, 1.0
        %v800 = vmul.f32 %v797, 0.5
        %v801 = vmul.f32 %v800, %v797
        %v802 = vsub.f32 %v798, 0.5
        %v803 = vsel %vm799, %v801, %v802
        %v805 = vrot.slane %v803, 5
        %v806 = vrot.slane %v805, 4
        %v808 = vadd.f32 %v791, %v806
        %v811 = vcombine.low %v757, %v758
        %v812 = vrot.slane %v811, 6
        %v814 = vsub.f32 %v312, %v812
        %v815 = vand.u32 2147483647, %v814
        %vm816 = vcmp.lt.f32.partialorder %v815, 1.0
        %v817 = vmul.f32 %v814, 0.5
        %v818 = vmul.f32 %v817, %v814
        %v819 = vsub.f32 %v815, 0.5
        %v820 = vsel %vm816, %v818, %v819
        %v822 = vrot.slane %v820, 6
        %v823 = vrot.slane %v822, 4
        %v825 = vadd.f32 %v808, %v823
        %v828 = vcombine.low %v779, %v780
        %v829 = vrot.slane %v828, 5
        %v831 = vsub.f32 %v312, %v829
        %v832 = vand.u32 2147483647, %v831
        %vm833 = vcmp.lt.f32.partialorder %v832, 1.0
        %v834 = vmul.f32 %v831, 0.5
        %v835 = vmul.f32 %v834, %v831
        %v836 = vsub.f32 %v832, 0.5
        %v837 = vsel %vm833, %v835, %v836
        %v839 = vrot.slane %v837, 7
        %v840 = vrot.slane %v839, 4
        %v842 = vadd.f32 %v825, %v840
        %v844 = vlaneseq
        %v845 = vshrl.u32 %v844, 7
        %v846 = vsub.s32 0, %v845
        %v847 = vrot.slane %v842, %v846
        %v848 = vlaneseq
        %v849 = vshrl.u32 %v848, 7
        %v850 = vsub.s32 4, %v849
        %v851 = vrot.slane %v842, %v850
        %v854 = vsel %vm671, %v847, 0.0
        %v855 = vsel %vm672, %v851, 0.0
        %vm856 = vcmask 1040384
        %v857 = vsel %vm856, %v854, 0.0
        %v858 = vsel %vm856, %v855, 0.0
        %v859 = vadd.f32 %v857, %v858
        %860 = vadd.xlane.f32.xlu0 %v859
        %v861 = vpop.xlane.xlu0 %860
        %vm862 = vcmp.eq.s32.totalorder %v478, %v669
        %vm863 = vcmp.eq.s32.totalorder %v478, %v670
        %v866 = vunpack.c.l.s4 1983009808
        %v867 = vunpack.c.0.s8 %v866
        %v868 = vlaneseq
        %v869 = vshrl.u32 %v868, 7
        %v870 = vsub.s32 %v867, %v869
        %v871 = vrot.slane %v313, %v870
        %v872 = vcombine.high %v871, %v871
        %v875 = vsel %vm862, %v871, 0.0
        %v876 = vsel %vm863, %v872, 0.0
        %vm877 = vcmask 1041408
        %v878 = vsel %vm877, %v875, 0.0
        %v879 = vrot.slane %v878, 4
        %v880 = vadd.f32 %v878, %v879
        %v881 = vrot.slane %v880, 2
        %v882 = vadd.f32 %v880, %v881
        %v883 = vrot.slane %v882, 1
        %v884 = vadd.f32 %v882, %v883
        %v885 = vsel %vm877, %v876, 0.0
        %v886 = vrot.slane %v885, 4
        %v887 = vadd.f32 %v885, %v886
        %v888 = vrot.slane %v887, 2
        %v889 = vadd.f32 %v887, %v888
        %v890 = vrot.slane %v889, 1
        %v891 = vadd.f32 %v889, %v890
        %v892 = vsel %vm877, %v871, -inf
        %v893 = vrot.slane %v892, 4
        %v894 = vmax.f32 %v892, %v893
        %v895 = vrot.slane %v894, 2
        %v896 = vmax.f32 %v894, %v895
        %v897 = vrot.slane %v896, 1
        %v898 = vmax.f32 %v896, %v897
        %v899 = vsel %vm877, %v872, -inf
        %v900 = vrot.slane %v899, 4
        %v901 = vmax.f32 %v899, %v900
        %v902 = vrot.slane %v901, 2
        %v903 = vmax.f32 %v901, %v902
        %v904 = vrot.slane %v903, 1
        %v905 = vmax.f32 %v903, %v904
        %v908 = vcombine.low %v898, %v905
        %v910 = vunpack.c.l.s4 1983009808
        %v911 = vunpack.c.0.s8 %v910
        %v912 = vlaneseq
        %v913 = vshrl.u32 %v912, 7
        %v914 = vsub.s32 %v911, %v913
        %v915 = vrot.slane %v908, %v914
        %v917 = vsub.f32 %v313, %v915
        %v918 = vmul.f32 %v917, 1.442695
        %v919 = vpow.pop %v918
        %v922 = vunpack.c.l.s4 1983009808
        %v923 = vunpack.c.0.s8 %v922
        %v924 = vlaneseq
        %v925 = vshrl.u32 %v924, 7
        %v926 = vsub.s32 %v923, %v925
        %v927 = vrot.slane %v919, %v926
        %v928 = vcombine.high %v927, %v927
        %v931 = vsel %vm877, %v927, 0.0
        %v932 = vrot.slane %v931, 4
        %v933 = vadd.f32 %v931, %v932
        %v934 = vrot.slane %v933, 2
        %v935 = vadd.f32 %v933, %v934
        %v936 = vrot.slane %v935, 1
        %v937 = vadd.f32 %v935, %v936
        %v938 = vsel %vm877, %v928, 0.0
        %v939 = vrot.slane %v938, 4
        %v940 = vadd.f32 %v938, %v939
        %v941 = vrot.slane %v940, 2
        %v942 = vadd.f32 %v940, %v941
        %v943 = vrot.slane %v942, 1
        %v944 = vadd.f32 %v942, %v943
        %v945 = vlog2.pop %v937
        %v946 = vmul.f32 %v945, 0.6931472
        %v947 = vlog2.pop %v944
        %v948 = vmul.f32 %v947, 0.6931472
        %v949 = vadd.f32 %v946, %v898
        %v950 = vadd.f32 %v948, %v905
        %v951 = vsub.f32 %v949, %v884
        %v952 = vsub.f32 %v950, %v891
        %v953 = vsel %vm671, 0.0, %v951
        %v954 = vsel %vm672, 0.0, %v952
        %v955 = vmax.f32 %v953, 0.0
        %v956 = vmax.f32 %v954, 0.0
        %v957 = vsel %vm671, 1, 0
        %v958 = vsel %vm672, 1, 0
        %v959 = vcvt.s32.f32 %v957
        %v960 = vcvt.s32.f32 %v958
        %v961 = vadd.f32 %v959, %v960
        %962 = vadd.xlane.f32.xlu0 %v961
        %v963 = vpop.xlane.xlu0 %962
        %v964 = vmul.f32 %v963, 3.0
        %v965 = vmin.f32 %v964, 255.0
        %vm968 = vcmp.gt.s32.totalorder %v955, %v956
        %v969 = vsel %vm968, %v955, %v956
        %v970 = vand.u32 %v969, 65535
        %v971 = vshra.s32 %v969, 16
        %v972 = vcvt.s32.f32 %v970
        %v973 = vcvt.s32.f32 %v971
        %974 = vmax.xlane.f32.xlu0 %v973
        %v975 = vpop.xlane.xlu0 %974
        %vm976 = vcmp.eq.f32.partialorder %v973, %v975
        %v977 = vsel %vm976, %v972, -inf
        %978 = vmax.xlane.f32.xlu0 %v977
        %v979 = vpop.xlane.xlu0 %978
        %v980 = vcvt.f32.s32 %v979
        %v981 = vcvt.f32.s32 %v975
        %v982 = vshll.u32 %v981, 16
        %v983 = vadd.s32 %v982, %v980
        loop: start=0, step=1, limit=32
        $region49: #{tpu_custom_call.1} parent=39 // loop_pre_header
          _
        $region50: #{tpu_custom_call.1} parent=39 // loop_header
          %s985 = sphi 0, %s989
          %p986 = scmp.ge.s32.totalorder %s985, 32
          %v990 = vphi 0, %v1006
          %v991 = vphi %v983, %v1008
        $region51: #{tpu_custom_call.1} parent=39 // loop_header_branch
          %988 = sbr.rel (%p986) target = $region55
        $region52: #{tpu_custom_call.1} parent=39 // loop_body
          %v992 = vsub.s32 %v991, %v990
          %v993 = vadd.s32 %v992, 1
          %v994 = vshra.s32 %v993, 1
          %v995 = vadd.s32 %v990, %v994
          %vm996 = vcmp.ge.s32.totalorder %v955, %v995
          %vm997 = vcmp.ge.s32.totalorder %v956, %v995
          %v998 = vsel %vm996, 1, 0
          %v999 = vsel %vm997, 1, 0
          %v1000 = vcvt.s32.f32 %v998
          %v1001 = vcvt.s32.f32 %v999
          %v1002 = vadd.f32 %v1000, %v1001
          %1003 = vadd.xlane.f32.xlu0 %v1002
          %v1004 = vpop.xlane.xlu0 %1003
          %vm1005 = vcmp.ge.f32.partialorder %v1004, %v965
          %v1006 = vsel %vm1005, %v995, %v990
          %v1007 = vsub.s32 %v995, 1
          %v1008 = vsel %vm1005, %v991, %v1007
        $region53: #{tpu_custom_call.1} parent=39 // loop_footer
          %s989 = sadd.s32 1, %s985
        $region54: #{tpu_custom_call.1} parent=39 // loop_footer_branch
          %984 = sbr.rel target = $region50
        $region55: #{tpu_custom_call.1} parent=39 // loop_exit
          _
        %vm1009 = vcmp.gt.s32.totalorder %v955, %v990
        %vm1010 = vcmp.gt.s32.totalorder %v956, %v990
        %vm1011 = vcmp.eq.s32.totalorder %v955, %v990
        %vm1012 = vcmp.eq.s32.totalorder %v956, %v990
        %v1013 = vsel %vm1009, 1, 0
        %v1014 = vsel %vm1010, 1, 0
        %v1015 = vcvt.s32.f32 %v1013
        %v1016 = vcvt.s32.f32 %v1014
        %v1017 = vadd.f32 %v1015, %v1016
        %1018 = vadd.xlane.f32.xlu0 %v1017
        %v1019 = vpop.xlane.xlu0 %1018
        %v1020 = vsub.f32 %v965, %v1019
        %v1021 = vmax.f32 %v1020, 0.0
        %v1022 = vsel %vm1011, %v955, 0.0
        %v1023 = vsel %vm1012, %v956, 0.0
        %v1024 = vmax.f32 %v1022, %v1023
        %1025 = vmax.xlane.f32.xlu0 %v1024
        %v1026 = vpop.xlane.xlu0 %1025
        %vm1027 = vmor %vm671, %vm1009
        %vm1028 = vmor %vm672, %vm1010
        %v1029 = vsel %vm1027, %v951, 0.0
        %v1030 = vsel %vm1028, %v952, 0.0
        %v1031 = vadd.f32 %v1029, %v1030
        %1032 = vadd.xlane.f32.xlu0 %v1031
        %v1033 = vpop.xlane.xlu0 %1032
        %v1034 = vmul.f32 %v1021, %v1026
        %v1035 = vadd.f32 %v1033, %v1034
        %vm1036 = vcmp.eq.s32.totalorder %v480, 0
        %v1037 = vsel %vm1036, %v861, 0.0
        %vm1038 = vcmp.eq.s32.totalorder %v480, 1
        %v1039 = vsel %vm1038, %v1035, 0.0
        %v1040 = vadd.f32 %v1037, %v1039
        %vm1041 = vcmp.eq.s32.totalorder %v480, 2
        %v1042 = vsel %vm1041, %v963, 0.0
        %v1043 = vadd.f32 %v1040, %v1042
        %1044 = vst [vmem:[%s294] sm:$0x1] %v1043
        %s1045 = sand.u32 %s156, 1
        %s1046 = scalar_lea.sflag [#allocation4], %s1045
        %s1047 = sand.u32 %s156, 1
        %s1048 = scalar_lea.vmem [#allocation7], %s1047
        // Predicated region
        $region56: #{tpu_custom_call.1} parent=39 // pred_check
          %p1049 = pneg %p166
        $region57: #{tpu_custom_call.1} parent=39 // pred_check_branch
          %1051 = sbr.rel (%p1049) target = $region59
        $region58: #{tpu_custom_call.1} parent=39 // pred_region
          %s1053 = ssub.s32 16, 16
          %1054 = vsyncadd %s1046, %s1053
          %s1055 = smul.addr %s23, 16
          %s1056 = scalar_lea.hbm %s5, %s1055
          %s1058 = sshll.u32 %s1048, 4
          %s1059 = int_to_ptr.vmem [resolvable:$true] %s1058
          %1061 = dma.vmem_to_hbm [thread:$0]  %s1059, 16, %s1056, %s1046
        $region59: #{tpu_custom_call.1} parent=39 // pred_fallthru
          _
      $region40: #{tpu_custom_call.1} parent=5 // pred_fallthru
        _
      %p1062 = scmp.le.s32.totalorder 2, %s18
      // Predicated region
      $region60: #{tpu_custom_call.1} parent=5 // pred_check
        %p1063 = pneg %p1062
      $region61: #{tpu_custom_call.1} parent=5 // pred_check_branch
        %1065 = sbr.rel (%p1063) target = $region63
      $region62: #{tpu_custom_call.1} parent=5 // pred_region
        %s1066 = ssub.s32 %s18, 2
        // Predicated region
        $region64: #{tpu_custom_call.1} parent=62 // pred_check
          %p1067 = pneg %p172
        $region65: #{tpu_custom_call.1} parent=62 // pred_check_branch
          %1069 = sbr.rel (%p1067) target = $region67
        $region66: #{tpu_custom_call.1} parent=62 // pred_region
          %s1070 = sand.u32 %s157, 1
          %s1071 = scalar_lea.sflag [#allocation4], %s1070
          %s1072 = sand.u32 %s157, 1
          %s1073 = scalar_lea.vmem [#allocation7], %s1072
          %1074 = dma.done %s1071, 16
        $region67: #{tpu_custom_call.1} parent=62 // pred_fallthru
          _
      $region63: #{tpu_custom_call.1} parent=5 // pred_fallthru
        _
    $region6: #{tpu_custom_call.1} parent=1 // loop_footer
      %s22 = sadd.s32 1, %s18
    $region7: #{tpu_custom_call.1} parent=1 // loop_footer_branch
      %17 = sbr.rel target = $region3
    $region8: #{tpu_custom_call.1} parent=1 // loop_exit
      _
    %1075 = vsyncpa [#allocation3], 1
    %s1076 = scalar_lea.sflag [#allocation3], 1
    %1077 = vsyncpa %s1076, 1
    %1078 = vsyncpa [#allocation6], 1
    %1079 = vsyncpa [#allocation4], 1
    %s1080 = scalar_lea.sflag [#allocation4], 1
    %1081 = vsyncpa %s1080, 1

</llo_original>
